<compile_context>
chip_gen: v6e
topology: v6e:2x2x1
jax: 0.10.0
libtpu: 0.0.40
codegen_flags: <defaults>
</compile_context>

<pallas_src>
import functools

import jax
import jax.numpy as jnp
from jax.experimental import pallas as pl
from jax.experimental.pallas import tpu as pltpu


_OUT_LANES = 128  # lane-dense width for the probability output


def _lstm_kernel(xproj_ref,      # (TC, Bp, 4H) precomputed x @ Wih0 + b0 (time-major chunk)
                 whh0_ref,       # (H, 4H)      layer-0 recurrent weights  [i,f,o,g] cols
                 wih1_ref,       # (H, 4H)      layer-1 input weights      [i,f,o,g] cols
                 whh1_ref,       # (H, 4H)      layer-1 recurrent weights  [i,f,o,g] cols
                 b1_ref,         # (1, 4H)
                 wfc_ref,        # (1, H)
                 bfc_ref,        # (1, 1)
                 out_ref,        # (Bp, 128)    sigmoid(fc(h_last)) broadcast over lanes
                 hc_ref):        # (Bp, 4H)     packed [h0 | h1 | c0 | c1]
    TC, Bp, G = xproj_ref.shape
    H = whh0_ref.shape[0]

    tchunk = pl.program_id(0)

    # Initialize the resident state slab on the first time chunk.
    @pl.when(tchunk == 0)
    def _():
        hc_ref[...] = jnp.zeros_like(hc_ref)

    # Hoist weight loads and the bias broadcast above the time loop
    # (JAX does not CSE broadcast_in_dim inside loops).
    whh0 = whh0_ref[...]
    wih1 = wih1_ref[...]
    whh1 = whh1_ref[...]
    b1 = jnp.broadcast_to(b1_ref[...], (Bp, G))

    # Unpack carried state (output block is resident across the time axis).
    hc = hc_ref[...]
    h0 = hc[:, 0 * H:1 * H]
    h1 = hc[:, 1 * H:2 * H]
    c0 = hc[:, 2 * H:3 * H]
    c1 = hc[:, 3 * H:4 * H]

    def _sigmoid(x):
        # Single EUP transcendental per call: sigmoid(x) = 0.5*tanh(0.5*x) + 0.5.
        return 0.5 * jnp.tanh(0.5 * x) + 0.5

    def gates_to_hc(g, c):
        # Gate columns pre-reordered to [i, f, o, g]: one sigmoid over a
        # contiguous 3H slice, one tanh over the remaining H slice.
        s = _sigmoid(g[:, :3 * H])
        gg = jnp.tanh(g[:, 3 * H:])
        i = s[:, 0 * H:1 * H]
        f = s[:, 1 * H:2 * H]
        o = s[:, 2 * H:3 * H]
        c_new = f * c + i * gg
        h_new = o * jnp.tanh(c_new)
        return h_new, c_new

    def step(t, carry):
        h0, c0, h1, c1 = carry
        # Layer 0: only the recurrent dot remains on the serial path.
        g0 = xproj_ref[t] + jnp.dot(h0, whh0, preferred_element_type=jnp.float32)
        # Layer 1 recurrent dot depends only on h1_prev -> issue it before
        # layer-0's activations so the MXU push overlaps the EUP/VPU work
        # (no concat false dependency).
        r1 = jnp.dot(h1, whh1, preferred_element_type=jnp.float32) + b1
        h0, c0 = gates_to_hc(g0, c0)
        # Layer 1 input dot on the freshly produced h0.
        g1 = jnp.dot(h0, wih1, preferred_element_type=jnp.float32) + r1
        h1, c1 = gates_to_hc(g1, c1)
        return (h0, c0, h1, c1)

    h0, c0, h1, c1 = jax.lax.fori_loop(0, TC, step, (h0, c0, h1, c1),
                                       unroll=min(TC, 8))

    # Single lane-dense (Bp, 4H) store of the packed state (replaces four masked
    # 32-lane stores). Concatenate happens once per chunk, off the per-step path.
    hc_ref[...] = jnp.concatenate([h0, h1, c0, c1], axis=-1)

    # fc (H -> 1) + sigmoid on the last chunk only: VPU multiply + lane reduce,
    # result broadcast across the full 128-lane row (unmasked store).
    @pl.when(tchunk == pl.num_programs(0) - 1)
    def _():
        logits = jnp.sum(h1 * wfc_ref[...], axis=-1, keepdims=True) + bfc_ref[...]
        prob = 0.5 * jnp.tanh(0.5 * logits) + 0.5
        out_ref[...] = jnp.broadcast_to(prob, out_ref.shape)


def _reorder_gates(w):
    """Permute 4H gate columns from PyTorch [i, f, g, o] to kernel [i, f, o, g]."""
    i, f, g, o = jnp.split(w, 4, axis=-1)
    return jnp.concatenate([i, f, o, g], axis=-1)


@functools.partial(jax.jit, static_argnames=())
def sentiment_lstm_forward(x_ids, params):
    """Forward pass of SentimentLSTM.

    x_ids: (B, T) int32 token ids.
    Returns (out, (h_n, c_n)) where out is (B,), h_n/c_n are (2, B, H).
    """
    emb_table = params["embedding"]          # (V, E)
    B, T = x_ids.shape
    H = params["whh0"].shape[0]
    G = 4 * H

    # Embedding gather directly in time-major order (T, B, E).
    emb = jnp.take(emb_table, x_ids.T, axis=0)                          # (T, B, E)

    # Gate-column reorder ([i,f,g,o] -> [i,f,o,g]) applied offline to all weights.
    wih0 = _reorder_gates(params["wih0"])                               # (E, 4H)
    b0 = _reorder_gates(params["b0"])                                   # (1, 4H)
    whh0 = _reorder_gates(params["whh0"])                               # (H, 4H)
    wih1 = _reorder_gates(params["wih1"])                               # (H, 4H)
    whh1 = _reorder_gates(params["whh1"])                               # (H, 4H)
    b1 = _reorder_gates(params["b1"])                                   # (1, 4H)
    wfc_row = params["wfc"].T                                           # (1, H)
    bfc = params["bfc"]                                                 # (1, 1)

    # Layer-0 input projection hoisted out of the serial recurrence (bias folded).
    xproj = jnp.dot(emb, wih0,
                    preferred_element_type=jnp.float32) + b0            # (T, B, 4H)

    # Pad batch to the f32 sublane count so every vreg row / store is unmasked.
    Bp = max(8, ((B + 7) // 8) * 8)
    if Bp != B:
        xproj = jnp.pad(xproj, ((0, 0), (0, Bp - B), (0, 0)))

    # Stream xproj in T-chunks (largest candidate dividing T) so only one chunk
    # (double-buffered) is VMEM-resident, not the whole (T, B, 4H) array.
    TC = next(c for c in (64, 32, 16, 8, 4, 2, 1) if T % c == 0)
    NT = T // TC

    grid_spec = pltpu.PrefetchScalarGridSpec(
        num_scalar_prefetch=0,
        grid=(NT,),
        in_specs=[
            pl.BlockSpec((TC, Bp, G), lambda t: (t, 0, 0)),   # xproj chunk
            pl.BlockSpec((H, G), lambda t: (0, 0)),           # whh0 (resident)
            pl.BlockSpec((H, G), lambda t: (0, 0)),           # wih1 (resident)
            pl.BlockSpec((H, G), lambda t: (0, 0)),           # whh1 (resident)
            pl.BlockSpec((1, G), lambda t: (0, 0)),           # b1
            pl.BlockSpec((1, H), lambda t: (0, 0)),           # wfc
            pl.BlockSpec((1, 1), lambda t: (0, 0)),           # bfc
        ],
        out_specs=[
            pl.BlockSpec((Bp, _OUT_LANES), lambda t: (0, 0)),  # prob (lane-dense)
            pl.BlockSpec((Bp, G), lambda t: (0, 0)),           # packed [h0|h1|c0|c1]
        ],
    )

    out_shapes = (
        jax.ShapeDtypeStruct((Bp, _OUT_LANES), jnp.float32),
        jax.ShapeDtypeStruct((Bp, G), jnp.float32),
    )

    out, hc = pl.pallas_call(
        _lstm_kernel,
        grid_spec=grid_spec,
        out_shape=out_shapes,
        compiler_params=pltpu.CompilerParams(
            dimension_semantics=("arbitrary",),        # time is a carried axis
            vmem_limit_bytes=32 * 1024 * 1024,
        ),
    )(xproj, whh0, wih1, whh1, b1, wfc_row, bfc)

    # Unpack: out (B,1) -> (B,) since output_dim == 1; states back to (2, B, H).
    prob = out[:B, 0]
    h0 = hc[:B, 0 * H:1 * H]
    h1 = hc[:B, 1 * H:2 * H]
    c0 = hc[:B, 2 * H:3 * H]
    c1 = hc[:B, 3 * H:4 * H]
    h_n = jnp.stack([h0, h1])
    c_n = jnp.stack([c0, c1])
    return prob, (h_n, c_n)


def make_params(key, vocab_dim, embedding_dim, hidden_dim):
    """Deterministic synthetic parameters (shapes match nn.Embedding / nn.LSTM / nn.Linear)."""
    ks = jax.random.split(key, 12)
    H, E = hidden_dim, embedding_dim
    s = 0.1

    def rnd(k, shape):
        return (s * jax.random.normal(k, shape)).astype(jnp.float32)

    # PyTorch LSTM stores W_ih (4H, in), W_hh (4H, H), b_ih (4H,), b_hh (4H,)
    # We pre-transpose weights and fold b_ih + b_hh into one (1, 4H) bias.
    return {
        "embedding": rnd(ks[0], (vocab_dim, E)),
        "wih0": rnd(ks[1], (4 * H, E)).T,                      # (E, 4H)
        "whh0": rnd(ks[2], (4 * H, H)).T,                      # (H, 4H)
        "b0": (rnd(ks[3], (4 * H,)) + rnd(ks[4], (4 * H,)))[None, :],
        "wih1": rnd(ks[5], (4 * H, H)).T,                      # (H, 4H)
        "whh1": rnd(ks[6], (4 * H, H)).T,                      # (H, 4H)
        "b1": (rnd(ks[7], (4 * H,)) + rnd(ks[8], (4 * H,)))[None, :],
        "wfc": rnd(ks[9], (1, H)).T,                           # (H, 1)
        "bfc": rnd(ks[10], (1,))[None, :],                     # (1, 1)
    }


def reference_forward(x_ids, params):
    """Pure-JAX reference (matches PyTorch LSTM eval semantics, gate order i,f,g,o)."""
    emb = jnp.take(params["embedding"], x_ids, axis=0)  # (B, T, E)
    B, T, E = emb.shape
    H = params["whh0"].shape[0]

    def cell(x, h, c, wih, whh, b):
        g = x @ wih + h @ whh + b
        i, f, gg, o = jnp.split(g, 4, axis=-1)
        c_new = jax.nn.sigmoid(f) * c + jax.nn.sigmoid(i) * jnp.tanh(gg)
        h_new = jax.nn.sigmoid(o) * jnp.tanh(c_new)
        return h_new, c_new

    def step(carry, x_t):
        h0, c0, h1, c1 = carry
        h0, c0 = cell(x_t, h0, c0, params["wih0"], params["whh0"], params["b0"])
        h1, c1 = cell(h0, h1, c1, params["wih1"], params["whh1"], params["b1"])
        return (h0, c0, h1, c1), h1

    z = jnp.zeros((B, H), jnp.float32)
    (h0, c0, h1, c1), outs = jax.lax.scan(step, (z, z, z, z),
                                          jnp.transpose(emb, (1, 0, 2)))
    last = outs[-1]                                           # (B, H)
    out = jax.nn.sigmoid(last @ params["wfc"] + params["bfc"])[:, 0]
    h_n = jnp.stack([h0, h1])
    c_n = jnp.stack([c0, c1])
    return out, (h_n, c_n)


if __name__ == "__main__":
    # Small shapes consistent with the module: batch=2, seq=8, vocab=50, embed=32, hidden=32.
    B, T = 2, 8
    vocab_dim, embedding_dim, hidden_dim = 50, 32, 32

    key = jax.random.PRNGKey(0)
    k_param, k_ids = jax.random.split(key)
    params = make_params(k_param, vocab_dim, embedding_dim, hidden_dim)
    x_ids = jax.random.randint(k_ids, (B, T), 0, vocab_dim, dtype=jnp.int32)

    out, (h_n, c_n) = sentiment_lstm_forward(x_ids, params)
    jax.block_until_ready((out, h_n, c_n))

    out_ref, (h_ref, c_ref) = reference_forward(x_ids, params)
    assert jnp.allclose(out, out_ref, atol=1e-5), "output mismatch"
    assert jnp.allclose(h_n, h_ref, atol=1e-5), "h_n mismatch"
    assert jnp.allclose(c_n, c_ref, atol=1e-5), "c_n mismatch"

    print("KERNEL_OK")
</pallas_src>

<mosaic_0001>
module attributes {stable_mosaic.version = 11 : i64} {
  func.func @_lstm_kernel(%arg0: i32, %arg1: memref<8x8x128xf32, #tpu.memory_space<vmem>>, %arg2: memref<32x128xf32, #tpu.memory_space<vmem>>, %arg3: memref<32x128xf32, #tpu.memory_space<vmem>>, %arg4: memref<32x128xf32, #tpu.memory_space<vmem>>, %arg5: memref<1x128xf32, #tpu.memory_space<vmem>>, %arg6: memref<1x32xf32, #tpu.memory_space<vmem>>, %arg7: memref<1x1xf32, #tpu.memory_space<vmem>>, %arg8: memref<8x128xf32, #tpu.memory_space<vmem>>, %arg9: memref<8x128xf32, #tpu.memory_space<vmem>>) attributes {dimension_semantics = [#tpu.dimension_semantics<arbitrary>], iteration_bounds = array<i64: 1>, scalar_prefetch = 0 : i64, scratch_operands = 0 : i64, tpu.core_type = #tpu.core_type<tc>, window_params = [{transform_indices = @transform_0, window_bounds = array<i64: 8, 8, 128>}, {pipeline_mode = #tpu.pipeline_mode<synchronous>, transform_indices = @transform_1, window_bounds = array<i64: 32, 128>}, {pipeline_mode = #tpu.pipeline_mode<synchronous>, transform_indices = @transform_2, window_bounds = array<i64: 32, 128>}, {pipeline_mode = #tpu.pipeline_mode<synchronous>, transform_indices = @transform_3, window_bounds = array<i64: 32, 128>}, {pipeline_mode = #tpu.pipeline_mode<synchronous>, transform_indices = @transform_4, window_bounds = array<i64: 1, 128>}, {pipeline_mode = #tpu.pipeline_mode<synchronous>, transform_indices = @transform_5, window_bounds = array<i64: 1, 32>}, {pipeline_mode = #tpu.pipeline_mode<synchronous>, transform_indices = @transform_6, window_bounds = array<i64: 1, 1>}, {pipeline_mode = #tpu.pipeline_mode<synchronous>, transform_indices = @transform_7, window_bounds = array<i64: 8, 128>}, {pipeline_mode = #tpu.pipeline_mode<synchronous>, transform_indices = @transform_8, window_bounds = array<i64: 8, 128>}]} {
    %c0_i32 = arith.constant 0 : i32
    %0 = arith.cmpi eq, %arg0, %c0_i32 : i32
    %1 = arith.extui %0 : i1 to i32
    %c0_i32_0 = arith.constant 0 : i32
    %2 = arith.cmpi ne, %1, %c0_i32_0 : i32
    scf.if %2 {
      %cst_102 = arith.constant 0.000000e+00 : f32
      %379 = vector.broadcast %cst_102 : f32 to vector<8x128xf32>
      %c0_103 = arith.constant 0 : index
      %c0_104 = arith.constant 0 : index
      %380 = vector.load %arg9[%c0_103, %c0_104] : memref<8x128xf32, #tpu.memory_space<vmem>>, vector<8x128xf32>
      tpu.vector_store %arg9[%c0_103, %c0_104], %379 {strides = array<i32>} : memref<8x128xf32, #tpu.memory_space<vmem>>, vector<8x128xf32>,
    } else {
    }
    %c0 = arith.constant 0 : index
    %c0_1 = arith.constant 0 : index
    %3 = vector.load %arg2[%c0, %c0_1] : memref<32x128xf32, #tpu.memory_space<vmem>>, vector<32x128xf32>
    %c0_2 = arith.constant 0 : index
    %c0_3 = arith.constant 0 : index
    %4 = vector.load %arg3[%c0_2, %c0_3] : memref<32x128xf32, #tpu.memory_space<vmem>>, vector<32x128xf32>
    %c0_4 = arith.constant 0 : index
    %c0_5 = arith.constant 0 : index
    %5 = vector.load %arg4[%c0_4, %c0_5] : memref<32x128xf32, #tpu.memory_space<vmem>>, vector<32x128xf32>
    %c0_6 = arith.constant 0 : index
    %c0_7 = arith.constant 0 : index
    %6 = vector.load %arg5[%c0_6, %c0_7] : memref<1x128xf32, #tpu.memory_space<vmem>>, vector<1x128xf32>
    %7 = vector.shape_cast %6 : vector<1x128xf32> to vector<1x128xf32>
    %8 = vector.broadcast %7 : vector<1x128xf32> to vector<8x128xf32>
    %c0_8 = arith.constant 0 : index
    %c0_9 = arith.constant 0 : index
    %9 = vector.load %arg9[%c0_8, %c0_9] : memref<8x128xf32, #tpu.memory_space<vmem>>, vector<8x128xf32>
    %10 = vector.extract_strided_slice %9 {offsets = [0, 0], sizes = [8, 32], strides = [1, 1]} : vector<8x128xf32> to vector<8x32xf32>
    %11 = vector.extract_strided_slice %9 {offsets = [0, 32], sizes = [8, 32], strides = [1, 1]} : vector<8x128xf32> to vector<8x32xf32>
    %12 = vector.extract_strided_slice %9 {offsets = [0, 64], sizes = [8, 32], strides = [1, 1]} : vector<8x128xf32> to vector<8x32xf32>
    %13 = vector.extract_strided_slice %9 {offsets = [0, 96], sizes = [8, 32], strides = [1, 1]} : vector<8x128xf32> to vector<8x32xf32>
    %c0_i32_10 = arith.constant 0 : i32
    %14 = arith.index_cast %c0_i32_10 : i32 to index
    %c0_11 = arith.constant 0 : index
    %c0_12 = arith.constant 0 : index
    %15 = vector.load %arg1[%14, %c0_11, %c0_12] : memref<8x8x128xf32, #tpu.memory_space<vmem>>, vector<1x8x128xf32>
    %16 = vector.shape_cast %15 : vector<1x8x128xf32> to vector<8x128xf32>
    %cst = arith.constant dense<0.000000e+00> : vector<8x128xf32>
    %17 = tpu.matmul %10, %3, %cst {dimension_numbers = #tpu.dot_dimension_numbers<[1], [0], [0], [1], [0, 0, 1, 1], [], []>} : vector<8x32xf32>, vector<32x128xf32>, vector<8x128xf32> -> vector<8x128xf32>
    %18 = arith.addf %16, %17 : vector<8x128xf32>
    %cst_13 = arith.constant dense<0.000000e+00> : vector<8x128xf32>
    %19 = tpu.matmul %11, %5, %cst_13 {dimension_numbers = #tpu.dot_dimension_numbers<[1], [0], [0], [1], [0, 0, 1, 1], [], []>} : vector<8x32xf32>, vector<32x128xf32>, vector<8x128xf32> -> vector<8x128xf32>
    %20 = arith.addf %19, %8 : vector<8x128xf32>
    %21 = vector.extract_strided_slice %18 {offsets = [0, 0], sizes = [8, 96], strides = [1, 1]} : vector<8x128xf32> to vector<8x96xf32>
    %cst_14 = arith.constant 5.000000e-01 : f32
    %22 = vector.broadcast %cst_14 : f32 to vector<8x96xf32>
    %23 = arith.mulf %22, %21 : vector<8x96xf32>
    %24 = math.tanh %23 : vector<8x96xf32>
    %cst_15 = arith.constant 5.000000e-01 : f32
    %25 = vector.broadcast %cst_15 : f32 to vector<8x96xf32>
    %26 = arith.mulf %25, %24 : vector<8x96xf32>
    %cst_16 = arith.constant 5.000000e-01 : f32
    %27 = vector.broadcast %cst_16 : f32 to vector<8x96xf32>
    %28 = arith.addf %26, %27 : vector<8x96xf32>
    %29 = vector.extract_strided_slice %18 {offsets = [0, 96], sizes = [8, 32], strides = [1, 1]} : vector<8x128xf32> to vector<8x32xf32>
    %30 = math.tanh %29 : vector<8x32xf32>
    %31 = vector.extract_strided_slice %28 {offsets = [0, 0], sizes = [8, 32], strides = [1, 1]} : vector<8x96xf32> to vector<8x32xf32>
    %32 = vector.extract_strided_slice %28 {offsets = [0, 32], sizes = [8, 32], strides = [1, 1]} : vector<8x96xf32> to vector<8x32xf32>
    %33 = vector.extract_strided_slice %28 {offsets = [0, 64], sizes = [8, 32], strides = [1, 1]} : vector<8x96xf32> to vector<8x32xf32>
    %34 = arith.mulf %32, %12 : vector<8x32xf32>
    %35 = arith.mulf %31, %30 : vector<8x32xf32>
    %36 = arith.addf %34, %35 : vector<8x32xf32>
    %37 = math.tanh %36 : vector<8x32xf32>
    %38 = arith.mulf %33, %37 : vector<8x32xf32>
    %cst_17 = arith.constant dense<0.000000e+00> : vector<8x128xf32>
    %39 = tpu.matmul %38, %4, %cst_17 {dimension_numbers = #tpu.dot_dimension_numbers<[1], [0], [0], [1], [0, 0, 1, 1], [], []>} : vector<8x32xf32>, vector<32x128xf32>, vector<8x128xf32> -> vector<8x128xf32>
    %40 = arith.addf %39, %20 : vector<8x128xf32>
    %41 = vector.extract_strided_slice %40 {offsets = [0, 0], sizes = [8, 96], strides = [1, 1]} : vector<8x128xf32> to vector<8x96xf32>
    %cst_18 = arith.constant 5.000000e-01 : f32
    %42 = vector.broadcast %cst_18 : f32 to vector<8x96xf32>
    %43 = arith.mulf %42, %41 : vector<8x96xf32>
    %44 = math.tanh %43 : vector<8x96xf32>
    %cst_19 = arith.constant 5.000000e-01 : f32
    %45 = vector.broadcast %cst_19 : f32 to vector<8x96xf32>
    %46 = arith.mulf %45, %44 : vector<8x96xf32>
    %cst_20 = arith.constant 5.000000e-01 : f32
    %47 = vector.broadcast %cst_20 : f32 to vector<8x96xf32>
    %48 = arith.addf %46, %47 : vector<8x96xf32>
    %49 = vector.extract_strided_slice %40 {offsets = [0, 96], sizes = [8, 32], strides = [1, 1]} : vector<8x128xf32> to vector<8x32xf32>
    %50 = math.tanh %49 : vector<8x32xf32>
    %51 = vector.extract_strided_slice %48 {offsets = [0, 0], sizes = [8, 32], strides = [1, 1]} : vector<8x96xf32> to vector<8x32xf32>
    %52 = vector.extract_strided_slice %48 {offsets = [0, 32], sizes = [8, 32], strides = [1, 1]} : vector<8x96xf32> to vector<8x32xf32>
    %53 = vector.extract_strided_slice %48 {offsets = [0, 64], sizes = [8, 32], strides = [1, 1]} : vector<8x96xf32> to vector<8x32xf32>
    %54 = arith.mulf %52, %13 : vector<8x32xf32>
    %55 = arith.mulf %51, %50 : vector<8x32xf32>
    %56 = arith.addf %54, %55 : vector<8x32xf32>
    %57 = math.tanh %56 : vector<8x32xf32>
    %58 = arith.mulf %53, %57 : vector<8x32xf32>
    %c1_i32 = arith.constant 1 : i32
    %59 = arith.index_cast %c1_i32 : i32 to index
    %c0_21 = arith.constant 0 : index
    %c0_22 = arith.constant 0 : index
    %60 = vector.load %arg1[%59, %c0_21, %c0_22] : memref<8x8x128xf32, #tpu.memory_space<vmem>>, vector<1x8x128xf32>
    %61 = vector.shape_cast %60 : vector<1x8x128xf32> to vector<8x128xf32>
    %cst_23 = arith.constant dense<0.000000e+00> : vector<8x128xf32>
    %62 = tpu.matmul %38, %3, %cst_23 {dimension_numbers = #tpu.dot_dimension_numbers<[1], [0], [0], [1], [0, 0, 1, 1], [], []>} : vector<8x32xf32>, vector<32x128xf32>, vector<8x128xf32> -> vector<8x128xf32>
    %63 = arith.addf %61, %62 : vector<8x128xf32>
    %cst_24 = arith.constant dense<0.000000e+00> : vector<8x128xf32>
    %64 = tpu.matmul %58, %5, %cst_24 {dimension_numbers = #tpu.dot_dimension_numbers<[1], [0], [0], [1], [0, 0, 1, 1], [], []>} : vector<8x32xf32>, vector<32x128xf32>, vector<8x128xf32> -> vector<8x128xf32>
    %65 = arith.addf %64, %8 : vector<8x128xf32>
    %66 = vector.extract_strided_slice %63 {offsets = [0, 0], sizes = [8, 96], strides = [1, 1]} : vector<8x128xf32> to vector<8x96xf32>
    %cst_25 = arith.constant 5.000000e-01 : f32
    %67 = vector.broadcast %cst_25 : f32 to vector<8x96xf32>
    %68 = arith.mulf %67, %66 : vector<8x96xf32>
    %69 = math.tanh %68 : vector<8x96xf32>
    %cst_26 = arith.constant 5.000000e-01 : f32
    %70 = vector.broadcast %cst_26 : f32 to vector<8x96xf32>
    %71 = arith.mulf %70, %69 : vector<8x96xf32>
    %cst_27 = arith.constant 5.000000e-01 : f32
    %72 = vector.broadcast %cst_27 : f32 to vector<8x96xf32>
    %73 = arith.addf %71, %72 : vector<8x96xf32>
    %74 = vector.extract_strided_slice %63 {offsets = [0, 96], sizes = [8, 32], strides = [1, 1]} : vector<8x128xf32> to vector<8x32xf32>
    %75 = math.tanh %74 : vector<8x32xf32>
    %76 = vector.extract_strided_slice %73 {offsets = [0, 0], sizes = [8, 32], strides = [1, 1]} : vector<8x96xf32> to vector<8x32xf32>
    %77 = vector.extract_strided_slice %73 {offsets = [0, 32], sizes = [8, 32], strides = [1, 1]} : vector<8x96xf32> to vector<8x32xf32>
    %78 = vector.extract_strided_slice %73 {offsets = [0, 64], sizes = [8, 32], strides = [1, 1]} : vector<8x96xf32> to vector<8x32xf32>
    %79 = arith.mulf %77, %36 : vector<8x32xf32>
    %80 = arith.mulf %76, %75 : vector<8x32xf32>
    %81 = arith.addf %79, %80 : vector<8x32xf32>
    %82 = math.tanh %81 : vector<8x32xf32>
    %83 = arith.mulf %78, %82 : vector<8x32xf32>
    %cst_28 = arith.constant dense<0.000000e+00> : vector<8x128xf32>
    %84 = tpu.matmul %83, %4, %cst_28 {dimension_numbers = #tpu.dot_dimension_numbers<[1], [0], [0], [1], [0, 0, 1, 1], [], []>} : vector<8x32xf32>, vector<32x128xf32>, vector<8x128xf32> -> vector<8x128xf32>
    %85 = arith.addf %84, %65 : vector<8x128xf32>
    %86 = vector.extract_strided_slice %85 {offsets = [0, 0], sizes = [8, 96], strides = [1, 1]} : vector<8x128xf32> to vector<8x96xf32>
    %cst_29 = arith.constant 5.000000e-01 : f32
    %87 = vector.broadcast %cst_29 : f32 to vector<8x96xf32>
    %88 = arith.mulf %87, %86 : vector<8x96xf32>
    %89 = math.tanh %88 : vector<8x96xf32>
    %cst_30 = arith.constant 5.000000e-01 : f32
    %90 = vector.broadcast %cst_30 : f32 to vector<8x96xf32>
    %91 = arith.mulf %90, %89 : vector<8x96xf32>
    %cst_31 = arith.constant 5.000000e-01 : f32
    %92 = vector.broadcast %cst_31 : f32 to vector<8x96xf32>
    %93 = arith.addf %91, %92 : vector<8x96xf32>
    %94 = vector.extract_strided_slice %85 {offsets = [0, 96], sizes = [8, 32], strides = [1, 1]} : vector<8x128xf32> to vector<8x32xf32>
    %95 = math.tanh %94 : vector<8x32xf32>
    %96 = vector.extract_strided_slice %93 {offsets = [0, 0], sizes = [8, 32], strides = [1, 1]} : vector<8x96xf32> to vector<8x32xf32>
    %97 = vector.extract_strided_slice %93 {offsets = [0, 32], sizes = [8, 32], strides = [1, 1]} : vector<8x96xf32> to vector<8x32xf32>
    %98 = vector.extract_strided_slice %93 {offsets = [0, 64], sizes = [8, 32], strides = [1, 1]} : vector<8x96xf32> to vector<8x32xf32>
    %99 = arith.mulf %97, %56 : vector<8x32xf32>
    %100 = arith.mulf %96, %95 : vector<8x32xf32>
    %101 = arith.addf %99, %100 : vector<8x32xf32>
    %102 = math.tanh %101 : vector<8x32xf32>
    %103 = arith.mulf %98, %102 : vector<8x32xf32>
    %c2_i32 = arith.constant 2 : i32
    %104 = arith.index_cast %c2_i32 : i32 to index
    %c0_32 = arith.constant 0 : index
    %c0_33 = arith.constant 0 : index
    %105 = vector.load %arg1[%104, %c0_32, %c0_33] : memref<8x8x128xf32, #tpu.memory_space<vmem>>, vector<1x8x128xf32>
    %106 = vector.shape_cast %105 : vector<1x8x128xf32> to vector<8x128xf32>
    %cst_34 = arith.constant dense<0.000000e+00> : vector<8x128xf32>
    %107 = tpu.matmul %83, %3, %cst_34 {dimension_numbers = #tpu.dot_dimension_numbers<[1], [0], [0], [1], [0, 0, 1, 1], [], []>} : vector<8x32xf32>, vector<32x128xf32>, vector<8x128xf32> -> vector<8x128xf32>
    %108 = arith.addf %106, %107 : vector<8x128xf32>
    %cst_35 = arith.constant dense<0.000000e+00> : vector<8x128xf32>
    %109 = tpu.matmul %103, %5, %cst_35 {dimension_numbers = #tpu.dot_dimension_numbers<[1], [0], [0], [1], [0, 0, 1, 1], [], []>} : vector<8x32xf32>, vector<32x128xf32>, vector<8x128xf32> -> vector<8x128xf32>
    %110 = arith.addf %109, %8 : vector<8x128xf32>
    %111 = vector.extract_strided_slice %108 {offsets = [0, 0], sizes = [8, 96], strides = [1, 1]} : vector<8x128xf32> to vector<8x96xf32>
    %cst_36 = arith.constant 5.000000e-01 : f32
    %112 = vector.broadcast %cst_36 : f32 to vector<8x96xf32>
    %113 = arith.mulf %112, %111 : vector<8x96xf32>
    %114 = math.tanh %113 : vector<8x96xf32>
    %cst_37 = arith.constant 5.000000e-01 : f32
    %115 = vector.broadcast %cst_37 : f32 to vector<8x96xf32>
    %116 = arith.mulf %115, %114 : vector<8x96xf32>
    %cst_38 = arith.constant 5.000000e-01 : f32
    %117 = vector.broadcast %cst_38 : f32 to vector<8x96xf32>
    %118 = arith.addf %116, %117 : vector<8x96xf32>
    %119 = vector.extract_strided_slice %108 {offsets = [0, 96], sizes = [8, 32], strides = [1, 1]} : vector<8x128xf32> to vector<8x32xf32>
    %120 = math.tanh %119 : vector<8x32xf32>
    %121 = vector.extract_strided_slice %118 {offsets = [0, 0], sizes = [8, 32], strides = [1, 1]} : vector<8x96xf32> to vector<8x32xf32>
    %122 = vector.extract_strided_slice %118 {offsets = [0, 32], sizes = [8, 32], strides = [1, 1]} : vector<8x96xf32> to vector<8x32xf32>
    %123 = vector.extract_strided_slice %118 {offsets = [0, 64], sizes = [8, 32], strides = [1, 1]} : vector<8x96xf32> to vector<8x32xf32>
    %124 = arith.mulf %122, %81 : vector<8x32xf32>
    %125 = arith.mulf %121, %120 : vector<8x32xf32>
    %126 = arith.addf %124, %125 : vector<8x32xf32>
    %127 = math.tanh %126 : vector<8x32xf32>
    %128 = arith.mulf %123, %127 : vector<8x32xf32>
    %cst_39 = arith.constant dense<0.000000e+00> : vector<8x128xf32>
    %129 = tpu.matmul %128, %4, %cst_39 {dimension_numbers = #tpu.dot_dimension_numbers<[1], [0], [0], [1], [0, 0, 1, 1], [], []>} : vector<8x32xf32>, vector<32x128xf32>, vector<8x128xf32> -> vector<8x128xf32>
    %130 = arith.addf %129, %110 : vector<8x128xf32>
    %131 = vector.extract_strided_slice %130 {offsets = [0, 0], sizes = [8, 96], strides = [1, 1]} : vector<8x128xf32> to vector<8x96xf32>
    %cst_40 = arith.constant 5.000000e-01 : f32
    %132 = vector.broadcast %cst_40 : f32 to vector<8x96xf32>
    %133 = arith.mulf %132, %131 : vector<8x96xf32>
    %134 = math.tanh %133 : vector<8x96xf32>
    %cst_41 = arith.constant 5.000000e-01 : f32
    %135 = vector.broadcast %cst_41 : f32 to vector<8x96xf32>
    %136 = arith.mulf %135, %134 : vector<8x96xf32>
    %cst_42 = arith.constant 5.000000e-01 : f32
    %137 = vector.broadcast %cst_42 : f32 to vector<8x96xf32>
    %138 = arith.addf %136, %137 : vector<8x96xf32>
    %139 = vector.extract_strided_slice %130 {offsets = [0, 96], sizes = [8, 32], strides = [1, 1]} : vector<8x128xf32> to vector<8x32xf32>
    %140 = math.tanh %139 : vector<8x32xf32>
    %141 = vector.extract_strided_slice %138 {offsets = [0, 0], sizes = [8, 32], strides = [1, 1]} : vector<8x96xf32> to vector<8x32xf32>
    %142 = vector.extract_strided_slice %138 {offsets = [0, 32], sizes = [8, 32], strides = [1, 1]} : vector<8x96xf32> to vector<8x32xf32>
    %143 = vector.extract_strided_slice %138 {offsets = [0, 64], sizes = [8, 32], strides = [1, 1]} : vector<8x96xf32> to vector<8x32xf32>
    %144 = arith.mulf %142, %101 : vector<8x32xf32>
    %145 = arith.mulf %141, %140 : vector<8x32xf32>
    %146 = arith.addf %144, %145 : vector<8x32xf32>
    %147 = math.tanh %146 : vector<8x32xf32>
    %148 = arith.mulf %143, %147 : vector<8x32xf32>
    %c3_i32 = arith.constant 3 : i32
    %149 = arith.index_cast %c3_i32 : i32 to index
    %c0_43 = arith.constant 0 : index
    %c0_44 = arith.constant 0 : index
    %150 = vector.load %arg1[%149, %c0_43, %c0_44] : memref<8x8x128xf32, #tpu.memory_space<vmem>>, vector<1x8x128xf32>
    %151 = vector.shape_cast %150 : vector<1x8x128xf32> to vector<8x128xf32>
    %cst_45 = arith.constant dense<0.000000e+00> : vector<8x128xf32>
    %152 = tpu.matmul %128, %3, %cst_45 {dimension_numbers = #tpu.dot_dimension_numbers<[1], [0], [0], [1], [0, 0, 1, 1], [], []>} : vector<8x32xf32>, vector<32x128xf32>, vector<8x128xf32> -> vector<8x128xf32>
    %153 = arith.addf %151, %152 : vector<8x128xf32>
    %cst_46 = arith.constant dense<0.000000e+00> : vector<8x128xf32>
    %154 = tpu.matmul %148, %5, %cst_46 {dimension_numbers = #tpu.dot_dimension_numbers<[1], [0], [0], [1], [0, 0, 1, 1], [], []>} : vector<8x32xf32>, vector<32x128xf32>, vector<8x128xf32> -> vector<8x128xf32>
    %155 = arith.addf %154, %8 : vector<8x128xf32>
    %156 = vector.extract_strided_slice %153 {offsets = [0, 0], sizes = [8, 96], strides = [1, 1]} : vector<8x128xf32> to vector<8x96xf32>
    %cst_47 = arith.constant 5.000000e-01 : f32
    %157 = vector.broadcast %cst_47 : f32 to vector<8x96xf32>
    %158 = arith.mulf %157, %156 : vector<8x96xf32>
    %159 = math.tanh %158 : vector<8x96xf32>
    %cst_48 = arith.constant 5.000000e-01 : f32
    %160 = vector.broadcast %cst_48 : f32 to vector<8x96xf32>
    %161 = arith.mulf %160, %159 : vector<8x96xf32>
    %cst_49 = arith.constant 5.000000e-01 : f32
    %162 = vector.broadcast %cst_49 : f32 to vector<8x96xf32>
    %163 = arith.addf %161, %162 : vector<8x96xf32>
    %164 = vector.extract_strided_slice %153 {offsets = [0, 96], sizes = [8, 32], strides = [1, 1]} : vector<8x128xf32> to vector<8x32xf32>
    %165 = math.tanh %164 : vector<8x32xf32>
    %166 = vector.extract_strided_slice %163 {offsets = [0, 0], sizes = [8, 32], strides = [1, 1]} : vector<8x96xf32> to vector<8x32xf32>
    %167 = vector.extract_strided_slice %163 {offsets = [0, 32], sizes = [8, 32], strides = [1, 1]} : vector<8x96xf32> to vector<8x32xf32>
    %168 = vector.extract_strided_slice %163 {offsets = [0, 64], sizes = [8, 32], strides = [1, 1]} : vector<8x96xf32> to vector<8x32xf32>
    %169 = arith.mulf %167, %126 : vector<8x32xf32>
    %170 = arith.mulf %166, %165 : vector<8x32xf32>
    %171 = arith.addf %169, %170 : vector<8x32xf32>
    %172 = math.tanh %171 : vector<8x32xf32>
    %173 = arith.mulf %168, %172 : vector<8x32xf32>
    %cst_50 = arith.constant dense<0.000000e+00> : vector<8x128xf32>
    %174 = tpu.matmul %173, %4, %cst_50 {dimension_numbers = #tpu.dot_dimension_numbers<[1], [0], [0], [1], [0, 0, 1, 1], [], []>} : vector<8x32xf32>, vector<32x128xf32>, vector<8x128xf32> -> vector<8x128xf32>
    %175 = arith.addf %174, %155 : vector<8x128xf32>
    %176 = vector.extract_strided_slice %175 {offsets = [0, 0], sizes = [8, 96], strides = [1, 1]} : vector<8x128xf32> to vector<8x96xf32>
    %cst_51 = arith.constant 5.000000e-01 : f32
    %177 = vector.broadcast %cst_51 : f32 to vector<8x96xf32>
    %178 = arith.mulf %177, %176 : vector<8x96xf32>
    %179 = math.tanh %178 : vector<8x96xf32>
    %cst_52 = arith.constant 5.000000e-01 : f32
    %180 = vector.broadcast %cst_52 : f32 to vector<8x96xf32>
    %181 = arith.mulf %180, %179 : vector<8x96xf32>
    %cst_53 = arith.constant 5.000000e-01 : f32
    %182 = vector.broadcast %cst_53 : f32 to vector<8x96xf32>
    %183 = arith.addf %181, %182 : vector<8x96xf32>
    %184 = vector.extract_strided_slice %175 {offsets = [0, 96], sizes = [8, 32], strides = [1, 1]} : vector<8x128xf32> to vector<8x32xf32>
    %185 = math.tanh %184 : vector<8x32xf32>
    %186 = vector.extract_strided_slice %183 {offsets = [0, 0], sizes = [8, 32], strides = [1, 1]} : vector<8x96xf32> to vector<8x32xf32>
    %187 = vector.extract_strided_slice %183 {offsets = [0, 32], sizes = [8, 32], strides = [1, 1]} : vector<8x96xf32> to vector<8x32xf32>
    %188 = vector.extract_strided_slice %183 {offsets = [0, 64], sizes = [8, 32], strides = [1, 1]} : vector<8x96xf32> to vector<8x32xf32>
    %189 = arith.mulf %187, %146 : vector<8x32xf32>
    %190 = arith.mulf %186, %185 : vector<8x32xf32>
    %191 = arith.addf %189, %190 : vector<8x32xf32>
    %192 = math.tanh %191 : vector<8x32xf32>
    %193 = arith.mulf %188, %192 : vector<8x32xf32>
    %c4_i32 = arith.constant 4 : i32
    %194 = arith.index_cast %c4_i32 : i32 to index
    %c0_54 = arith.constant 0 : index
    %c0_55 = arith.constant 0 : index
    %195 = vector.load %arg1[%194, %c0_54, %c0_55] : memref<8x8x128xf32, #tpu.memory_space<vmem>>, vector<1x8x128xf32>
    %196 = vector.shape_cast %195 : vector<1x8x128xf32> to vector<8x128xf32>
    %cst_56 = arith.constant dense<0.000000e+00> : vector<8x128xf32>
    %197 = tpu.matmul %173, %3, %cst_56 {dimension_numbers = #tpu.dot_dimension_numbers<[1], [0], [0], [1], [0, 0, 1, 1], [], []>} : vector<8x32xf32>, vector<32x128xf32>, vector<8x128xf32> -> vector<8x128xf32>
    %198 = arith.addf %196, %197 : vector<8x128xf32>
    %cst_57 = arith.constant dense<0.000000e+00> : vector<8x128xf32>
    %199 = tpu.matmul %193, %5, %cst_57 {dimension_numbers = #tpu.dot_dimension_numbers<[1], [0], [0], [1], [0, 0, 1, 1], [], []>} : vector<8x32xf32>, vector<32x128xf32>, vector<8x128xf32> -> vector<8x128xf32>
    %200 = arith.addf %199, %8 : vector<8x128xf32>
    %201 = vector.extract_strided_slice %198 {offsets = [0, 0], sizes = [8, 96], strides = [1, 1]} : vector<8x128xf32> to vector<8x96xf32>
    %cst_58 = arith.constant 5.000000e-01 : f32
    %202 = vector.broadcast %cst_58 : f32 to vector<8x96xf32>
    %203 = arith.mulf %202, %201 : vector<8x96xf32>
    %204 = math.tanh %203 : vector<8x96xf32>
    %cst_59 = arith.constant 5.000000e-01 : f32
    %205 = vector.broadcast %cst_59 : f32 to vector<8x96xf32>
    %206 = arith.mulf %205, %204 : vector<8x96xf32>
    %cst_60 = arith.constant 5.000000e-01 : f32
    %207 = vector.broadcast %cst_60 : f32 to vector<8x96xf32>
    %208 = arith.addf %206, %207 : vector<8x96xf32>
    %209 = vector.extract_strided_slice %198 {offsets = [0, 96], sizes = [8, 32], strides = [1, 1]} : vector<8x128xf32> to vector<8x32xf32>
    %210 = math.tanh %209 : vector<8x32xf32>
    %211 = vector.extract_strided_slice %208 {offsets = [0, 0], sizes = [8, 32], strides = [1, 1]} : vector<8x96xf32> to vector<8x32xf32>
    %212 = vector.extract_strided_slice %208 {offsets = [0, 32], sizes = [8, 32], strides = [1, 1]} : vector<8x96xf32> to vector<8x32xf32>
    %213 = vector.extract_strided_slice %208 {offsets = [0, 64], sizes = [8, 32], strides = [1, 1]} : vector<8x96xf32> to vector<8x32xf32>
    %214 = arith.mulf %212, %171 : vector<8x32xf32>
    %215 = arith.mulf %211, %210 : vector<8x32xf32>
    %216 = arith.addf %214, %215 : vector<8x32xf32>
    %217 = math.tanh %216 : vector<8x32xf32>
    %218 = arith.mulf %213, %217 : vector<8x32xf32>
    %cst_61 = arith.constant dense<0.000000e+00> : vector<8x128xf32>
    %219 = tpu.matmul %218, %4, %cst_61 {dimension_numbers = #tpu.dot_dimension_numbers<[1], [0], [0], [1], [0, 0, 1, 1], [], []>} : vector<8x32xf32>, vector<32x128xf32>, vector<8x128xf32> -> vector<8x128xf32>
    %220 = arith.addf %219, %200 : vector<8x128xf32>
    %221 = vector.extract_strided_slice %220 {offsets = [0, 0], sizes = [8, 96], strides = [1, 1]} : vector<8x128xf32> to vector<8x96xf32>
    %cst_62 = arith.constant 5.000000e-01 : f32
    %222 = vector.broadcast %cst_62 : f32 to vector<8x96xf32>
    %223 = arith.mulf %222, %221 : vector<8x96xf32>
    %224 = math.tanh %223 : vector<8x96xf32>
    %cst_63 = arith.constant 5.000000e-01 : f32
    %225 = vector.broadcast %cst_63 : f32 to vector<8x96xf32>
    %226 = arith.mulf %225, %224 : vector<8x96xf32>
    %cst_64 = arith.constant 5.000000e-01 : f32
    %227 = vector.broadcast %cst_64 : f32 to vector<8x96xf32>
    %228 = arith.addf %226, %227 : vector<8x96xf32>
    %229 = vector.extract_strided_slice %220 {offsets = [0, 96], sizes = [8, 32], strides = [1, 1]} : vector<8x128xf32> to vector<8x32xf32>
    %230 = math.tanh %229 : vector<8x32xf32>
    %231 = vector.extract_strided_slice %228 {offsets = [0, 0], sizes = [8, 32], strides = [1, 1]} : vector<8x96xf32> to vector<8x32xf32>
    %232 = vector.extract_strided_slice %228 {offsets = [0, 32], sizes = [8, 32], strides = [1, 1]} : vector<8x96xf32> to vector<8x32xf32>
    %233 = vector.extract_strided_slice %228 {offsets = [0, 64], sizes = [8, 32], strides = [1, 1]} : vector<8x96xf32> to vector<8x32xf32>
    %234 = arith.mulf %232, %191 : vector<8x32xf32>
    %235 = arith.mulf %231, %230 : vector<8x32xf32>
    %236 = arith.addf %234, %235 : vector<8x32xf32>
    %237 = math.tanh %236 : vector<8x32xf32>
    %238 = arith.mulf %233, %237 : vector<8x32xf32>
    %c5_i32 = arith.constant 5 : i32
    %239 = arith.index_cast %c5_i32 : i32 to index
    %c0_65 = arith.constant 0 : index
    %c0_66 = arith.constant 0 : index
    %240 = vector.load %arg1[%239, %c0_65, %c0_66] : memref<8x8x128xf32, #tpu.memory_space<vmem>>, vector<1x8x128xf32>
    %241 = vector.shape_cast %240 : vector<1x8x128xf32> to vector<8x128xf32>
    %cst_67 = arith.constant dense<0.000000e+00> : vector<8x128xf32>
    %242 = tpu.matmul %218, %3, %cst_67 {dimension_numbers = #tpu.dot_dimension_numbers<[1], [0], [0], [1], [0, 0, 1, 1], [], []>} : vector<8x32xf32>, vector<32x128xf32>, vector<8x128xf32> -> vector<8x128xf32>
    %243 = arith.addf %241, %242 : vector<8x128xf32>
    %cst_68 = arith.constant dense<0.000000e+00> : vector<8x128xf32>
    %244 = tpu.matmul %238, %5, %cst_68 {dimension_numbers = #tpu.dot_dimension_numbers<[1], [0], [0], [1], [0, 0, 1, 1], [], []>} : vector<8x32xf32>, vector<32x128xf32>, vector<8x128xf32> -> vector<8x128xf32>
    %245 = arith.addf %244, %8 : vector<8x128xf32>
    %246 = vector.extract_strided_slice %243 {offsets = [0, 0], sizes = [8, 96], strides = [1, 1]} : vector<8x128xf32> to vector<8x96xf32>
    %cst_69 = arith.constant 5.000000e-01 : f32
    %247 = vector.broadcast %cst_69 : f32 to vector<8x96xf32>
    %248 = arith.mulf %247, %246 : vector<8x96xf32>
    %249 = math.tanh %248 : vector<8x96xf32>
    %cst_70 = arith.constant 5.000000e-01 : f32
    %250 = vector.broadcast %cst_70 : f32 to vector<8x96xf32>
    %251 = arith.mulf %250, %249 : vector<8x96xf32>
    %cst_71 = arith.constant 5.000000e-01 : f32
    %252 = vector.broadcast %cst_71 : f32 to vector<8x96xf32>
    %253 = arith.addf %251, %252 : vector<8x96xf32>
    %254 = vector.extract_strided_slice %243 {offsets = [0, 96], sizes = [8, 32], strides = [1, 1]} : vector<8x128xf32> to vector<8x32xf32>
    %255 = math.tanh %254 : vector<8x32xf32>
    %256 = vector.extract_strided_slice %253 {offsets = [0, 0], sizes = [8, 32], strides = [1, 1]} : vector<8x96xf32> to vector<8x32xf32>
    %257 = vector.extract_strided_slice %253 {offsets = [0, 32], sizes = [8, 32], strides = [1, 1]} : vector<8x96xf32> to vector<8x32xf32>
    %258 = vector.extract_strided_slice %253 {offsets = [0, 64], sizes = [8, 32], strides = [1, 1]} : vector<8x96xf32> to vector<8x32xf32>
    %259 = arith.mulf %257, %216 : vector<8x32xf32>
    %260 = arith.mulf %256, %255 : vector<8x32xf32>
    %261 = arith.addf %259, %260 : vector<8x32xf32>
    %262 = math.tanh %261 : vector<8x32xf32>
    %263 = arith.mulf %258, %262 : vector<8x32xf32>
    %cst_72 = arith.constant dense<0.000000e+00> : vector<8x128xf32>
    %264 = tpu.matmul %263, %4, %cst_72 {dimension_numbers = #tpu.dot_dimension_numbers<[1], [0], [0], [1], [0, 0, 1, 1], [], []>} : vector<8x32xf32>, vector<32x128xf32>, vector<8x128xf32> -> vector<8x128xf32>
    %265 = arith.addf %264, %245 : vector<8x128xf32>
    %266 = vector.extract_strided_slice %265 {offsets = [0, 0], sizes = [8, 96], strides = [1, 1]} : vector<8x128xf32> to vector<8x96xf32>
    %cst_73 = arith.constant 5.000000e-01 : f32
    %267 = vector.broadcast %cst_73 : f32 to vector<8x96xf32>
    %268 = arith.mulf %267, %266 : vector<8x96xf32>
    %269 = math.tanh %268 : vector<8x96xf32>
    %cst_74 = arith.constant 5.000000e-01 : f32
    %270 = vector.broadcast %cst_74 : f32 to vector<8x96xf32>
    %271 = arith.mulf %270, %269 : vector<8x96xf32>
    %cst_75 = arith.constant 5.000000e-01 : f32
    %272 = vector.broadcast %cst_75 : f32 to vector<8x96xf32>
    %273 = arith.addf %271, %272 : vector<8x96xf32>
    %274 = vector.extract_strided_slice %265 {offsets = [0, 96], sizes = [8, 32], strides = [1, 1]} : vector<8x128xf32> to vector<8x32xf32>
    %275 = math.tanh %274 : vector<8x32xf32>
    %276 = vector.extract_strided_slice %273 {offsets = [0, 0], sizes = [8, 32], strides = [1, 1]} : vector<8x96xf32> to vector<8x32xf32>
    %277 = vector.extract_strided_slice %273 {offsets = [0, 32], sizes = [8, 32], strides = [1, 1]} : vector<8x96xf32> to vector<8x32xf32>
    %278 = vector.extract_strided_slice %273 {offsets = [0, 64], sizes = [8, 32], strides = [1, 1]} : vector<8x96xf32> to vector<8x32xf32>
    %279 = arith.mulf %277, %236 : vector<8x32xf32>
    %280 = arith.mulf %276, %275 : vector<8x32xf32>
    %281 = arith.addf %279, %280 : vector<8x32xf32>
    %282 = math.tanh %281 : vector<8x32xf32>
    %283 = arith.mulf %278, %282 : vector<8x32xf32>
    %c6_i32 = arith.constant 6 : i32
    %284 = arith.index_cast %c6_i32 : i32 to index
    %c0_76 = arith.constant 0 : index
    %c0_77 = arith.constant 0 : index
    %285 = vector.load %arg1[%284, %c0_76, %c0_77] : memref<8x8x128xf32, #tpu.memory_space<vmem>>, vector<1x8x128xf32>
    %286 = vector.shape_cast %285 : vector<1x8x128xf32> to vector<8x128xf32>
    %cst_78 = arith.constant dense<0.000000e+00> : vector<8x128xf32>
    %287 = tpu.matmul %263, %3, %cst_78 {dimension_numbers = #tpu.dot_dimension_numbers<[1], [0], [0], [1], [0, 0, 1, 1], [], []>} : vector<8x32xf32>, vector<32x128xf32>, vector<8x128xf32> -> vector<8x128xf32>
    %288 = arith.addf %286, %287 : vector<8x128xf32>
    %cst_79 = arith.constant dense<0.000000e+00> : vector<8x128xf32>
    %289 = tpu.matmul %283, %5, %cst_79 {dimension_numbers = #tpu.dot_dimension_numbers<[1], [0], [0], [1], [0, 0, 1, 1], [], []>} : vector<8x32xf32>, vector<32x128xf32>, vector<8x128xf32> -> vector<8x128xf32>
    %290 = arith.addf %289, %8 : vector<8x128xf32>
    %291 = vector.extract_strided_slice %288 {offsets = [0, 0], sizes = [8, 96], strides = [1, 1]} : vector<8x128xf32> to vector<8x96xf32>
    %cst_80 = arith.constant 5.000000e-01 : f32
    %292 = vector.broadcast %cst_80 : f32 to vector<8x96xf32>
    %293 = arith.mulf %292, %291 : vector<8x96xf32>
    %294 = math.tanh %293 : vector<8x96xf32>
    %cst_81 = arith.constant 5.000000e-01 : f32
    %295 = vector.broadcast %cst_81 : f32 to vector<8x96xf32>
    %296 = arith.mulf %295, %294 : vector<8x96xf32>
    %cst_82 = arith.constant 5.000000e-01 : f32
    %297 = vector.broadcast %cst_82 : f32 to vector<8x96xf32>
    %298 = arith.addf %296, %297 : vector<8x96xf32>
    %299 = vector.extract_strided_slice %288 {offsets = [0, 96], sizes = [8, 32], strides = [1, 1]} : vector<8x128xf32> to vector<8x32xf32>
    %300 = math.tanh %299 : vector<8x32xf32>
    %301 = vector.extract_strided_slice %298 {offsets = [0, 0], sizes = [8, 32], strides = [1, 1]} : vector<8x96xf32> to vector<8x32xf32>
    %302 = vector.extract_strided_slice %298 {offsets = [0, 32], sizes = [8, 32], strides = [1, 1]} : vector<8x96xf32> to vector<8x32xf32>
    %303 = vector.extract_strided_slice %298 {offsets = [0, 64], sizes = [8, 32], strides = [1, 1]} : vector<8x96xf32> to vector<8x32xf32>
    %304 = arith.mulf %302, %261 : vector<8x32xf32>
    %305 = arith.mulf %301, %300 : vector<8x32xf32>
    %306 = arith.addf %304, %305 : vector<8x32xf32>
    %307 = math.tanh %306 : vector<8x32xf32>
    %308 = arith.mulf %303, %307 : vector<8x32xf32>
    %cst_83 = arith.constant dense<0.000000e+00> : vector<8x128xf32>
    %309 = tpu.matmul %308, %4, %cst_83 {dimension_numbers = #tpu.dot_dimension_numbers<[1], [0], [0], [1], [0, 0, 1, 1], [], []>} : vector<8x32xf32>, vector<32x128xf32>, vector<8x128xf32> -> vector<8x128xf32>
    %310 = arith.addf %309, %290 : vector<8x128xf32>
    %311 = vector.extract_strided_slice %310 {offsets = [0, 0], sizes = [8, 96], strides = [1, 1]} : vector<8x128xf32> to vector<8x96xf32>
    %cst_84 = arith.constant 5.000000e-01 : f32
    %312 = vector.broadcast %cst_84 : f32 to vector<8x96xf32>
    %313 = arith.mulf %312, %311 : vector<8x96xf32>
    %314 = math.tanh %313 : vector<8x96xf32>
    %cst_85 = arith.constant 5.000000e-01 : f32
    %315 = vector.broadcast %cst_85 : f32 to vector<8x96xf32>
    %316 = arith.mulf %315, %314 : vector<8x96xf32>
    %cst_86 = arith.constant 5.000000e-01 : f32
    %317 = vector.broadcast %cst_86 : f32 to vector<8x96xf32>
    %318 = arith.addf %316, %317 : vector<8x96xf32>
    %319 = vector.extract_strided_slice %310 {offsets = [0, 96], sizes = [8, 32], strides = [1, 1]} : vector<8x128xf32> to vector<8x32xf32>
    %320 = math.tanh %319 : vector<8x32xf32>
    %321 = vector.extract_strided_slice %318 {offsets = [0, 0], sizes = [8, 32], strides = [1, 1]} : vector<8x96xf32> to vector<8x32xf32>
    %322 = vector.extract_strided_slice %318 {offsets = [0, 32], sizes = [8, 32], strides = [1, 1]} : vector<8x96xf32> to vector<8x32xf32>
    %323 = vector.extract_strided_slice %318 {offsets = [0, 64], sizes = [8, 32], strides = [1, 1]} : vector<8x96xf32> to vector<8x32xf32>
    %324 = arith.mulf %322, %281 : vector<8x32xf32>
    %325 = arith.mulf %321, %320 : vector<8x32xf32>
    %326 = arith.addf %324, %325 : vector<8x32xf32>
    %327 = math.tanh %326 : vector<8x32xf32>
    %328 = arith.mulf %323, %327 : vector<8x32xf32>
    %c7_i32 = arith.constant 7 : i32
    %329 = arith.index_cast %c7_i32 : i32 to index
    %c0_87 = arith.constant 0 : index
    %c0_88 = arith.constant 0 : index
    %330 = vector.load %arg1[%329, %c0_87, %c0_88] : memref<8x8x128xf32, #tpu.memory_space<vmem>>, vector<1x8x128xf32>
    %331 = vector.shape_cast %330 : vector<1x8x128xf32> to vector<8x128xf32>
    %cst_89 = arith.constant dense<0.000000e+00> : vector<8x128xf32>
    %332 = tpu.matmul %308, %3, %cst_89 {dimension_numbers = #tpu.dot_dimension_numbers<[1], [0], [0], [1], [0, 0, 1, 1], [], []>} : vector<8x32xf32>, vector<32x128xf32>, vector<8x128xf32> -> vector<8x128xf32>
    %333 = arith.addf %331, %332 : vector<8x128xf32>
    %cst_90 = arith.constant dense<0.000000e+00> : vector<8x128xf32>
    %334 = tpu.matmul %328, %5, %cst_90 {dimension_numbers = #tpu.dot_dimension_numbers<[1], [0], [0], [1], [0, 0, 1, 1], [], []>} : vector<8x32xf32>, vector<32x128xf32>, vector<8x128xf32> -> vector<8x128xf32>
    %335 = arith.addf %334, %8 : vector<8x128xf32>
    %336 = vector.extract_strided_slice %333 {offsets = [0, 0], sizes = [8, 96], strides = [1, 1]} : vector<8x128xf32> to vector<8x96xf32>
    %cst_91 = arith.constant 5.000000e-01 : f32
    %337 = vector.broadcast %cst_91 : f32 to vector<8x96xf32>
    %338 = arith.mulf %337, %336 : vector<8x96xf32>
    %339 = math.tanh %338 : vector<8x96xf32>
    %cst_92 = arith.constant 5.000000e-01 : f32
    %340 = vector.broadcast %cst_92 : f32 to vector<8x96xf32>
    %341 = arith.mulf %340, %339 : vector<8x96xf32>
    %cst_93 = arith.constant 5.000000e-01 : f32
    %342 = vector.broadcast %cst_93 : f32 to vector<8x96xf32>
    %343 = arith.addf %341, %342 : vector<8x96xf32>
    %344 = vector.extract_strided_slice %333 {offsets = [0, 96], sizes = [8, 32], strides = [1, 1]} : vector<8x128xf32> to vector<8x32xf32>
    %345 = math.tanh %344 : vector<8x32xf32>
    %346 = vector.extract_strided_slice %343 {offsets = [0, 0], sizes = [8, 32], strides = [1, 1]} : vector<8x96xf32> to vector<8x32xf32>
    %347 = vector.extract_strided_slice %343 {offsets = [0, 32], sizes = [8, 32], strides = [1, 1]} : vector<8x96xf32> to vector<8x32xf32>
    %348 = vector.extract_strided_slice %343 {offsets = [0, 64], sizes = [8, 32], strides = [1, 1]} : vector<8x96xf32> to vector<8x32xf32>
    %349 = arith.mulf %347, %306 : vector<8x32xf32>
    %350 = arith.mulf %346, %345 : vector<8x32xf32>
    %351 = arith.addf %349, %350 : vector<8x32xf32>
    %352 = math.tanh %351 : vector<8x32xf32>
    %353 = arith.mulf %348, %352 : vector<8x32xf32>
    %cst_94 = arith.constant dense<0.000000e+00> : vector<8x128xf32>
    %354 = tpu.matmul %353, %4, %cst_94 {dimension_numbers = #tpu.dot_dimension_numbers<[1], [0], [0], [1], [0, 0, 1, 1], [], []>} : vector<8x32xf32>, vector<32x128xf32>, vector<8x128xf32> -> vector<8x128xf32>
    %355 = arith.addf %354, %335 : vector<8x128xf32>
    %356 = vector.extract_strided_slice %355 {offsets = [0, 0], sizes = [8, 96], strides = [1, 1]} : vector<8x128xf32> to vector<8x96xf32>
    %cst_95 = arith.constant 5.000000e-01 : f32
    %357 = vector.broadcast %cst_95 : f32 to vector<8x96xf32>
    %358 = arith.mulf %357, %356 : vector<8x96xf32>
    %359 = math.tanh %358 : vector<8x96xf32>
    %cst_96 = arith.constant 5.000000e-01 : f32
    %360 = vector.broadcast %cst_96 : f32 to vector<8x96xf32>
    %361 = arith.mulf %360, %359 : vector<8x96xf32>
    %cst_97 = arith.constant 5.000000e-01 : f32
    %362 = vector.broadcast %cst_97 : f32 to vector<8x96xf32>
    %363 = arith.addf %361, %362 : vector<8x96xf32>
    %364 = vector.extract_strided_slice %355 {offsets = [0, 96], sizes = [8, 32], strides = [1, 1]} : vector<8x128xf32> to vector<8x32xf32>
    %365 = math.tanh %364 : vector<8x32xf32>
    %366 = vector.extract_strided_slice %363 {offsets = [0, 0], sizes = [8, 32], strides = [1, 1]} : vector<8x96xf32> to vector<8x32xf32>
    %367 = vector.extract_strided_slice %363 {offsets = [0, 32], sizes = [8, 32], strides = [1, 1]} : vector<8x96xf32> to vector<8x32xf32>
    %368 = vector.extract_strided_slice %363 {offsets = [0, 64], sizes = [8, 32], strides = [1, 1]} : vector<8x96xf32> to vector<8x32xf32>
    %369 = arith.mulf %367, %326 : vector<8x32xf32>
    %370 = arith.mulf %366, %365 : vector<8x32xf32>
    %371 = arith.addf %369, %370 : vector<8x32xf32>
    %372 = math.tanh %371 : vector<8x32xf32>
    %373 = arith.mulf %368, %372 : vector<8x32xf32>
    %c8_i32 = arith.constant 8 : i32
    %374 = tpu.concatenate %353, %373, %351, %371 in 1 : vector<8x32xf32>, vector<8x32xf32>, vector<8x32xf32>, vector<8x32xf32> -> vector<8x128xf32>
    %c0_98 = arith.constant 0 : index
    %c0_99 = arith.constant 0 : index
    %375 = vector.load %arg9[%c0_98, %c0_99] : memref<8x128xf32, #tpu.memory_space<vmem>>, vector<8x128xf32>
    tpu.vector_store %arg9[%c0_98, %c0_99], %374 {strides = array<i32>} : memref<8x128xf32, #tpu.memory_space<vmem>>, vector<8x128xf32>,
    %c0_i32_100 = arith.constant 0 : i32
    %376 = arith.cmpi eq, %arg0, %c0_i32_100 : i32
    %377 = arith.extui %376 : i1 to i32
    %c0_i32_101 = arith.constant 0 : i32
    %378 = arith.cmpi ne, %377, %c0_i32_101 : i32
    scf.if %378 {
      %c0_102 = arith.constant 0 : index
      %c0_103 = arith.constant 0 : index
      %379 = vector.load %arg6[%c0_102, %c0_103] : memref<1x32xf32, #tpu.memory_space<vmem>>, vector<1x32xf32>
      %380 = vector.broadcast %379 : vector<1x32xf32> to vector<8x32xf32>
      %381 = arith.mulf %373, %380 : vector<8x32xf32>
      %cst_104 = arith.constant dense<0.000000e+00> : vector<8xf32>
      %382 = vector.multi_reduction <add>, %381, %cst_104 [1] : vector<8x32xf32> to vector<8xf32>
      %383 = vector.shape_cast %382 : vector<8xf32> to vector<8x1xf32>
      %c0_105 = arith.constant 0 : index
      %c0_106 = arith.constant 0 : index
      %384 = vector.load %arg7[%c0_105, %c0_106] : memref<1x1xf32, #tpu.memory_space<vmem>>, vector<1x1xf32>
      %385 = vector.broadcast %384 : vector<1x1xf32> to vector<8x1xf32>
      %386 = arith.addf %383, %385 : vector<8x1xf32>
      %cst_107 = arith.constant 5.000000e-01 : f32
      %387 = vector.broadcast %cst_107 : f32 to vector<8x1xf32>
      %388 = arith.mulf %387, %386 : vector<8x1xf32>
      %389 = math.tanh %388 : vector<8x1xf32>
      %cst_108 = arith.constant 5.000000e-01 : f32
      %390 = vector.broadcast %cst_108 : f32 to vector<8x1xf32>
      %391 = arith.mulf %390, %389 : vector<8x1xf32>
      %cst_109 = arith.constant 5.000000e-01 : f32
      %392 = vector.broadcast %cst_109 : f32 to vector<8x1xf32>
      %393 = arith.addf %391, %392 : vector<8x1xf32>
      %394 = vector.shape_cast %393 : vector<8x1xf32> to vector<8x1xf32>
      %395 = vector.broadcast %394 : vector<8x1xf32> to vector<8x128xf32>
      %c0_110 = arith.constant 0 : index
      %c0_111 = arith.constant 0 : index
      %396 = vector.load %arg8[%c0_110, %c0_111] : memref<8x128xf32, #tpu.memory_space<vmem>>, vector<8x128xf32>
      tpu.vector_store %arg8[%c0_110, %c0_111], %395 {strides = array<i32>} : memref<8x128xf32, #tpu.memory_space<vmem>>, vector<8x128xf32>,
    } else {
    }
    return
  }
  func.func @transform_0(%arg0: i32) -> (i32, i32, i32) {
    %c0_i32 = arith.constant 0 : i32
    %c0_i32_0 = arith.constant 0 : i32
    %c0_i32_1 = arith.constant 0 : i32
    return %arg0, %c0_i32, %c0_i32_0 : i32, i32, i32
  }
  func.func @transform_1(%arg0: i32) -> (i32, i32) {
    %c0_i32 = arith.constant 0 : i32
    %c0_i32_0 = arith.constant 0 : i32
    %c0_i32_1 = arith.constant 0 : i32
    return %c0_i32, %c0_i32_0 : i32, i32
  }
  func.func @transform_2(%arg0: i32) -> (i32, i32) {
    %c0_i32 = arith.constant 0 : i32
    %c0_i32_0 = arith.constant 0 : i32
    %c0_i32_1 = arith.constant 0 : i32
    return %c0_i32, %c0_i32_0 : i32, i32
  }
  func.func @transform_3(%arg0: i32) -> (i32, i32) {
    %c0_i32 = arith.constant 0 : i32
    %c0_i32_0 = arith.constant 0 : i32
    %c0_i32_1 = arith.constant 0 : i32
    return %c0_i32, %c0_i32_0 : i32, i32
  }
  func.func @transform_4(%arg0: i32) -> (i32, i32) {
    %c0_i32 = arith.constant 0 : i32
    %c0_i32_0 = arith.constant 0 : i32
    %c0_i32_1 = arith.constant 0 : i32
    return %c0_i32, %c0_i32_0 : i32, i32
  }
  func.func @transform_5(%arg0: i32) -> (i32, i32) {
    %c0_i32 = arith.constant 0 : i32
    %c0_i32_0 = arith.constant 0 : i32
    %c0_i32_1 = arith.constant 0 : i32
    return %c0_i32, %c0_i32_0 : i32, i32
  }
  func.func @transform_6(%arg0: i32) -> (i32, i32) {
    %c0_i32 = arith.constant 0 : i32
    %c0_i32_0 = arith.constant 0 : i32
    %c0_i32_1 = arith.constant 0 : i32
    return %c0_i32, %c0_i32_0 : i32, i32
  }
  func.func @transform_7(%arg0: i32) -> (i32, i32) {
    %c0_i32 = arith.constant 0 : i32
    %c0_i32_0 = arith.constant 0 : i32
    %c0_i32_1 = arith.constant 0 : i32
    return %c0_i32, %c0_i32_0 : i32, i32
  }
  func.func @transform_8(%arg0: i32) -> (i32, i32) {
    %c0_i32 = arith.constant 0 : i32
    %c0_i32_0 = arith.constant 0 : i32
    %c0_i32_1 = arith.constant 0 : i32
    return %c0_i32, %c0_i32_0 : i32, i32
  }
}

</mosaic_0001>

<llo_original>
// kernel: sentiment_lstm_forward.1
$region0: #{sentiment_lstm_forward.1}
  #allocation0 [shape = 'u32[]', space=smem, size = 0x4, offset = 0x4, fixed_abs, tag = 'smem constant byte address 0x4 - core index']
  #allocation1 [shape = 'u32[144,128]{1,0:T(1,128)}', space=vmem, size = 0x12000, scoped, tag = 'internal scratch']
  #allocation2 [shape = 'f32[1,1]{1,0:T(1,128)S(1)}', space=vmem, size = 0x200, scoped, tag = 'scoped memory for sentiment_lstm_forward.1']
  %s0 = inlined_call_operand.vmem [shape: f32[8,8,128], index: 0, kind: input, shape index: {}]
  %s1 = inlined_call_operand.vmem [shape: f32[32,128], index: 1, kind: input, shape index: {}]
  %s2 = inlined_call_operand.vmem [shape: f32[32,128], index: 2, kind: input, shape index: {}]
  %s3 = inlined_call_operand.vmem [shape: f32[32,128], index: 3, kind: input, shape index: {}]
  %s4 = inlined_call_operand.vmem [shape: f32[1,128], index: 4, kind: input, shape index: {}]
  %s5 = inlined_call_operand.vmem [shape: f32[1,32], index: 5, kind: input, shape index: {}]
  %s6 = inlined_call_operand.<no memory space> [shape: f32[1,1], index: 6, kind: input, shape index: {}]
  %s7 = inlined_call_operand.vmem [shape: f32[8,128], index: 7, kind: output, shape index: {0}]
  %s8 = inlined_call_operand.vmem [shape: f32[8,128], index: 8, kind: output, shape index: {1}]
  %9 = xla_tuple %s7, %s8
  %s10 = sld [smem:[#allocation0]]
  $region54: #{sentiment_lstm_forward.1} parent=0
    _
  %s12 = ssub.s32 1, %s10
  %s13 = scalar_select 0, %s12, %s10
  %v14 = vstv %s6
  %15 = vst [vmem:[#allocation2] sm:$0x1] %v14
  // Predicated region
  $region2: #{sentiment_lstm_forward.1} parent=0 // pred_check
    _
  $region3: #{sentiment_lstm_forward.1} parent=0 // pred_check_branch
    %17 = sbr.rel (0) target = $region5
  $region4: #{sentiment_lstm_forward.1} parent=0 // pred_region
    _
  $region5: #{sentiment_lstm_forward.1} parent=0 // pred_fallthru
    _
  // Predicated region
  $region6: #{sentiment_lstm_forward.1} parent=0 // pred_check
    _
  $region7: #{sentiment_lstm_forward.1} parent=0 // pred_check_branch
    %19 = sbr.rel (0) target = $region9
  $region8: #{sentiment_lstm_forward.1} parent=0 // pred_region
    _
  $region9: #{sentiment_lstm_forward.1} parent=0 // pred_fallthru
    _
  // Predicated region
  $region10: #{sentiment_lstm_forward.1} parent=0 // pred_check
    _
  $region11: #{sentiment_lstm_forward.1} parent=0 // pred_check_branch
    %21 = sbr.rel (0) target = $region13
  $region12: #{sentiment_lstm_forward.1} parent=0 // pred_region
    _
  $region13: #{sentiment_lstm_forward.1} parent=0 // pred_fallthru
    _
  // Predicated region
  $region14: #{sentiment_lstm_forward.1} parent=0 // pred_check
    _
  $region15: #{sentiment_lstm_forward.1} parent=0 // pred_check_branch
    %23 = sbr.rel (0) target = $region17
  $region16: #{sentiment_lstm_forward.1} parent=0 // pred_region
    _
  $region17: #{sentiment_lstm_forward.1} parent=0 // pred_fallthru
    _
  // Predicated region
  $region18: #{sentiment_lstm_forward.1} parent=0 // pred_check
    _
  $region19: #{sentiment_lstm_forward.1} parent=0 // pred_check_branch
    %25 = sbr.rel (0) target = $region21
  $region20: #{sentiment_lstm_forward.1} parent=0 // pred_region
    _
  $region21: #{sentiment_lstm_forward.1} parent=0 // pred_fallthru
    _
  // Predicated region
  $region22: #{sentiment_lstm_forward.1} parent=0 // pred_check
    _
  $region23: #{sentiment_lstm_forward.1} parent=0 // pred_check_branch
    %27 = sbr.rel (0) target = $region25
  $region24: #{sentiment_lstm_forward.1} parent=0 // pred_region
    _
  $region25: #{sentiment_lstm_forward.1} parent=0 // pred_fallthru
    _
  // Predicated region
  $region26: #{sentiment_lstm_forward.1} parent=0 // pred_check
    _
  $region27: #{sentiment_lstm_forward.1} parent=0 // pred_check_branch
    %29 = sbr.rel (0) target = $region29
  $region28: #{sentiment_lstm_forward.1} parent=0 // pred_region
    _
  $region29: #{sentiment_lstm_forward.1} parent=0 // pred_fallthru
    _
  %p30 = scmp.eq.s32.totalorder 0, 0
  // Predicated region
  $region30: #{sentiment_lstm_forward.1} parent=0 // pred_check
    %p31 = pneg %p30
  $region31: #{sentiment_lstm_forward.1} parent=0 // pred_check_branch
    %33 = sbr.rel (%p31) target = $region33
  $region32: #{sentiment_lstm_forward.1} parent=0 // pred_region
    %34 = vst [vmem:[%s8] sm:$0xff] 0.0
  $region33: #{sentiment_lstm_forward.1} parent=0 // pred_fallthru
    _
  %v35 = vld [vmem:[%s1] sm:$0xff]
  %v36 = vld [vmem:[%s1 + $0x8] sm:$0xff]
  %v37 = vld [vmem:[%s1 + $0x10] sm:$0xff]
  %v38 = vld [vmem:[%s1 + $0x18] sm:$0xff]
  %v39 = vld [vmem:[%s2] sm:$0xff]
  %v40 = vld [vmem:[%s2 + $0x8] sm:$0xff]
  %v41 = vld [vmem:[%s2 + $0x10] sm:$0xff]
  %v42 = vld [vmem:[%s2 + $0x18] sm:$0xff]
  %v43 = vld [vmem:[%s3] sm:$0xff]
  %v44 = vld [vmem:[%s3 + $0x8] sm:$0xff]
  %v45 = vld [vmem:[%s3 + $0x10] sm:$0xff]
  %v46 = vld [vmem:[%s3 + $0x18] sm:$0xff]
  %v47 = vld [vmem:[%s4] sm:$0x1]
  %v49 = vlaneseq
  %v50 = vshrl.u32 %v49, 7
  %v51 = vsub.s32 0, %v50
  %v52 = vrot.slane %v47, %v51
  %v54 = vld [vmem:[%s8] sm:$0xff]
  %v55 = vld [vmem:[%s0] sm:$0xff]
  %vm56 = vcmask 261120
  %v58 = vsel %vm56, %v54, 0
  %60 = vmatprep.subr.mxu0 0.0
  %61 = vmatpush1.msra.mxu0 0.0
  %62 = vmatprep.subr.mxu0 0.0
  %63 = vmatpush1.msra.mxu0 0.0
  %64 = vmatprep.subr.mxu0 0.0
  %65 = vmatpush1.msra.mxu0 0.0
  %66 = vmatprep.subr.mxu0 0.0
  %67 = vmatpush1.msra.mxu0 0.0
  %68 = vmatprep.subr.mxu0 0.0
  %69 = vmatpush1.msra.mxu0 0.0
  %70 = vmatprep.subr.mxu0 0.0
  %71 = vmatpush1.msra.mxu0 0.0
  %72 = vmatprep.subr.mxu0 0.0
  %73 = vmatpush1.msra.mxu0 0.0
  %74 = vmatprep.subr.mxu0 0.0
  %75 = vmatpush1.msra.mxu0 0.0
  %76 = vmatprep.subr.mxu0 0.0
  %77 = vmatpush1.msra.mxu0 0.0
  %78 = vmatprep.subr.mxu0 0.0
  %79 = vmatpush1.msra.mxu0 0.0
  %80 = vmatprep.subr.mxu0 0.0
  %81 = vmatpush1.msra.mxu0 0.0
  %82 = vmatprep.subr.mxu0 0.0
  %83 = vmatpush1.msra.mxu0 0.0
  %84 = vmatprep.subr.mxu0 0.0
  %85 = vmatpush1.msra.mxu0 %v38
  %86 = vmatprep.subr.mxu0 0.0
  %87 = vmatpush1.msra.mxu0 %v37
  %88 = vmatprep.subr.mxu0 0.0
  %89 = vmatpush1.msra.mxu0 %v36
  %90 = vmatprep.subr.mxu0 0.0
  %91 = vmatpush1.msra.mxu0 %v35
  %92 = vmatprep.subr.mxu0 0.0
  %93 = vmatpush2.msra.mxu0 0.0
  %94 = vmatprep.subr.mxu0 0.0
  %95 = vmatpush2.msra.mxu0 0.0
  %96 = vmatprep.subr.mxu0 0.0
  %97 = vmatpush2.msra.mxu0 0.0
  %98 = vmatprep.subr.mxu0 0.0
  %99 = vmatpush2.msra.mxu0 0.0
  %100 = vmatprep.subr.mxu0 0.0
  %101 = vmatpush2.msra.mxu0 0.0
  %102 = vmatprep.subr.mxu0 0.0
  %103 = vmatpush2.msra.mxu0 0.0
  %104 = vmatprep.subr.mxu0 0.0
  %105 = vmatpush2.msra.mxu0 0.0
  %106 = vmatprep.subr.mxu0 0.0
  %107 = vmatpush2.msra.mxu0 0.0
  %108 = vmatprep.subr.mxu0 0.0
  %109 = vmatpush2.msra.mxu0 0.0
  %110 = vmatprep.subr.mxu0 0.0
  %111 = vmatpush2.msra.mxu0 0.0
  %112 = vmatprep.subr.mxu0 0.0
  %113 = vmatpush2.msra.mxu0 0.0
  %114 = vmatprep.subr.mxu0 0.0
  %115 = vmatpush2.msra.mxu0 0.0
  %116 = vmatprep.subr.mxu0 0.0
  %117 = vmatpush2.msra.mxu0 0.0
  %118 = vmatprep.subr.mxu0 0.0
  %119 = vmatpush2.msra.mxu0 0.0
  %120 = vmatprep.subr.mxu0 0.0
  %121 = vmatpush2.msra.mxu0 0.0
  %122 = vmatprep.subr.mxu0 0.0
  %123 = vmatpush2.msra.mxu0 0.0
  %124 = vmatprep.mubr.f32.mxu0 0.0
  %125 = vmatmul.mubr.f32.gmra.mxu0 %v58
  %v126 = vpop.f32.mrf.mxu0
  %v127 = vadd.f32 0.0, %v126
  %v128 = vpop.f32.mrf.mxu0
  %129 = vdwg.mxu0
  %v130 = vadd.f32 %v55, %v127
  %131 = vrot.lane.b32.xlu0 %v54, 96
  %v132 = vpop.permute.xlu0 %131
  %v133 = vsel %vm56, %v132, 0
  %135 = vmatprep.subr.mxu0 0.0
  %136 = vmatpush1.msra.mxu0 0.0
  %137 = vmatprep.subr.mxu0 0.0
  %138 = vmatpush1.msra.mxu0 0.0
  %139 = vmatprep.subr.mxu0 0.0
  %140 = vmatpush1.msra.mxu0 0.0
  %141 = vmatprep.subr.mxu0 0.0
  %142 = vmatpush1.msra.mxu0 0.0
  %143 = vmatprep.subr.mxu0 0.0
  %144 = vmatpush1.msra.mxu0 0.0
  %145 = vmatprep.subr.mxu0 0.0
  %146 = vmatpush1.msra.mxu0 0.0
  %147 = vmatprep.subr.mxu0 0.0
  %148 = vmatpush1.msra.mxu0 0.0
  %149 = vmatprep.subr.mxu0 0.0
  %150 = vmatpush1.msra.mxu0 0.0
  %151 = vmatprep.subr.mxu0 0.0
  %152 = vmatpush1.msra.mxu0 0.0
  %153 = vmatprep.subr.mxu0 0.0
  %154 = vmatpush1.msra.mxu0 0.0
  %155 = vmatprep.subr.mxu0 0.0
  %156 = vmatpush1.msra.mxu0 0.0
  %157 = vmatprep.subr.mxu0 0.0
  %158 = vmatpush1.msra.mxu0 0.0
  %159 = vmatprep.subr.mxu0 0.0
  %160 = vmatpush1.msra.mxu0 %v46
  %161 = vmatprep.subr.mxu0 0.0
  %162 = vmatpush1.msra.mxu0 %v45
  %163 = vmatprep.subr.mxu0 0.0
  %164 = vmatpush1.msra.mxu0 %v44
  %165 = vmatprep.subr.mxu0 0.0
  %166 = vmatpush1.msra.mxu0 %v43
  %167 = vmatprep.subr.mxu0 0.0
  %168 = vmatpush2.msra.mxu0 0.0
  %169 = vmatprep.subr.mxu0 0.0
  %170 = vmatpush2.msra.mxu0 0.0
  %171 = vmatprep.subr.mxu0 0.0
  %172 = vmatpush2.msra.mxu0 0.0
  %173 = vmatprep.subr.mxu0 0.0
  %174 = vmatpush2.msra.mxu0 0.0
  %175 = vmatprep.subr.mxu0 0.0
  %176 = vmatpush2.msra.mxu0 0.0
  %177 = vmatprep.subr.mxu0 0.0
  %178 = vmatpush2.msra.mxu0 0.0
  %179 = vmatprep.subr.mxu0 0.0
  %180 = vmatpush2.msra.mxu0 0.0
  %181 = vmatprep.subr.mxu0 0.0
  %182 = vmatpush2.msra.mxu0 0.0
  %183 = vmatprep.subr.mxu0 0.0
  %184 = vmatpush2.msra.mxu0 0.0
  %185 = vmatprep.subr.mxu0 0.0
  %186 = vmatpush2.msra.mxu0 0.0
  %187 = vmatprep.subr.mxu0 0.0
  %188 = vmatpush2.msra.mxu0 0.0
  %189 = vmatprep.subr.mxu0 0.0
  %190 = vmatpush2.msra.mxu0 0.0
  %191 = vmatprep.subr.mxu0 0.0
  %192 = vmatpush2.msra.mxu0 0.0
  %193 = vmatprep.subr.mxu0 0.0
  %194 = vmatpush2.msra.mxu0 0.0
  %195 = vmatprep.subr.mxu0 0.0
  %196 = vmatpush2.msra.mxu0 0.0
  %197 = vmatprep.subr.mxu0 0.0
  %198 = vmatpush2.msra.mxu0 0.0
  %199 = vmatprep.mubr.f32.mxu0 0.0
  %200 = vmatmul.mubr.f32.gmra.mxu0 %v133
  %v201 = vpop.f32.mrf.mxu0
  %v202 = vadd.f32 %v52, %v201
  %v203 = vpop.f32.mrf.mxu0
  %204 = vdwg.mxu0
  %v205 = vmul.f32 %v130, 0.5
  %v206 = vtanh.pop %v205
  %v207 = vmul.f32 %v206, 0.5
  %v208 = vadd.f32 %v207, 0.5
  %v209 = vtanh.pop %v130
  %v211 = vmul.f32 %v208, %v132
  %213 = vrot.lane.b32.xlu0 %v209, 32
  %v214 = vpop.permute.xlu0 %213
  %v216 = vmul.f32 %v208, %v214
  %218 = vrot.lane.b32.xlu0 %v216, 32
  %v219 = vpop.permute.xlu0 %218
  %v221 = vadd.f32 %v211, %v219
  %v222 = vtanh.pop %v221
  %224 = vrot.lane.b32.xlu0 %v222, 32
  %v225 = vpop.permute.xlu0 %224
  %v227 = vmul.f32 %v208, %v225
  %229 = vrot.lane.b32.xlu0 %v227, 64
  %v230 = vpop.permute.xlu0 %229
  %v231 = vsel %vm56, %v230, 0
  %233 = vmatprep.subr.mxu0 0.0
  %234 = vmatpush1.msra.mxu0 0.0
  %235 = vmatprep.subr.mxu0 0.0
  %236 = vmatpush1.msra.mxu0 0.0
  %237 = vmatprep.subr.mxu0 0.0
  %238 = vmatpush1.msra.mxu0 0.0
  %239 = vmatprep.subr.mxu0 0.0
  %240 = vmatpush1.msra.mxu0 0.0
  %241 = vmatprep.subr.mxu0 0.0
  %242 = vmatpush1.msra.mxu0 0.0
  %243 = vmatprep.subr.mxu0 0.0
  %244 = vmatpush1.msra.mxu0 0.0
  %245 = vmatprep.subr.mxu0 0.0
  %246 = vmatpush1.msra.mxu0 0.0
  %247 = vmatprep.subr.mxu0 0.0
  %248 = vmatpush1.msra.mxu0 0.0
  %249 = vmatprep.subr.mxu0 0.0
  %250 = vmatpush1.msra.mxu0 0.0
  %251 = vmatprep.subr.mxu0 0.0
  %252 = vmatpush1.msra.mxu0 0.0
  %253 = vmatprep.subr.mxu0 0.0
  %254 = vmatpush1.msra.mxu0 0.0
  %255 = vmatprep.subr.mxu0 0.0
  %256 = vmatpush1.msra.mxu0 0.0
  %257 = vmatprep.subr.mxu0 0.0
  %258 = vmatpush1.msra.mxu0 %v42
  %259 = vmatprep.subr.mxu0 0.0
  %260 = vmatpush1.msra.mxu0 %v41
  %261 = vmatprep.subr.mxu0 0.0
  %262 = vmatpush1.msra.mxu0 %v40
  %263 = vmatprep.subr.mxu0 0.0
  %264 = vmatpush1.msra.mxu0 %v39
  %265 = vmatprep.subr.mxu0 0.0
  %266 = vmatpush2.msra.mxu0 0.0
  %267 = vmatprep.subr.mxu0 0.0
  %268 = vmatpush2.msra.mxu0 0.0
  %269 = vmatprep.subr.mxu0 0.0
  %270 = vmatpush2.msra.mxu0 0.0
  %271 = vmatprep.subr.mxu0 0.0
  %272 = vmatpush2.msra.mxu0 0.0
  %273 = vmatprep.subr.mxu0 0.0
  %274 = vmatpush2.msra.mxu0 0.0
  %275 = vmatprep.subr.mxu0 0.0
  %276 = vmatpush2.msra.mxu0 0.0
  %277 = vmatprep.subr.mxu0 0.0
  %278 = vmatpush2.msra.mxu0 0.0
  %279 = vmatprep.subr.mxu0 0.0
  %280 = vmatpush2.msra.mxu0 0.0
  %281 = vmatprep.subr.mxu0 0.0
  %282 = vmatpush2.msra.mxu0 0.0
  %283 = vmatprep.subr.mxu0 0.0
  %284 = vmatpush2.msra.mxu0 0.0
  %285 = vmatprep.subr.mxu0 0.0
  %286 = vmatpush2.msra.mxu0 0.0
  %287 = vmatprep.subr.mxu0 0.0
  %288 = vmatpush2.msra.mxu0 0.0
  %289 = vmatprep.subr.mxu0 0.0
  %290 = vmatpush2.msra.mxu0 0.0
  %291 = vmatprep.subr.mxu0 0.0
  %292 = vmatpush2.msra.mxu0 0.0
  %293 = vmatprep.subr.mxu0 0.0
  %294 = vmatpush2.msra.mxu0 0.0
  %295 = vmatprep.subr.mxu0 0.0
  %296 = vmatpush2.msra.mxu0 0.0
  %297 = vmatprep.mubr.f32.mxu0 0.0
  %298 = vmatmul.mubr.f32.gmra.mxu0 %v231
  %v299 = vpop.f32.mrf.mxu0
  %v300 = vadd.f32 %v202, %v299
  %v301 = vpop.f32.mrf.mxu0
  %302 = vdwg.mxu0
  %v303 = vmul.f32 %v300, 0.5
  %v304 = vtanh.pop %v303
  %v305 = vmul.f32 %v304, 0.5
  %v306 = vadd.f32 %v305, 0.5
  %v307 = vtanh.pop %v300
  %308 = vrot.lane.b32.xlu0 %v54, 64
  %v309 = vpop.permute.xlu0 %308
  %v311 = vmul.f32 %v306, %v309
  %313 = vrot.lane.b32.xlu0 %v307, 32
  %v314 = vpop.permute.xlu0 %313
  %v316 = vmul.f32 %v306, %v314
  %318 = vrot.lane.b32.xlu0 %v316, 32
  %v319 = vpop.permute.xlu0 %318
  %v321 = vadd.f32 %v311, %v319
  %v322 = vtanh.pop %v321
  %324 = vrot.lane.b32.xlu0 %v322, 32
  %v325 = vpop.permute.xlu0 %324
  %v327 = vmul.f32 %v306, %v325
  %s328 = scalar_lea.vmem %s0, 8
  %v329 = vld [vmem:[%s328] sm:$0xff]
  %330 = vmatprep.subr.mxu0 0.0
  %331 = vmatpush1.msra.mxu0 0.0
  %332 = vmatprep.subr.mxu0 0.0
  %333 = vmatpush1.msra.mxu0 0.0
  %334 = vmatprep.subr.mxu0 0.0
  %335 = vmatpush1.msra.mxu0 0.0
  %336 = vmatprep.subr.mxu0 0.0
  %337 = vmatpush1.msra.mxu0 0.0
  %338 = vmatprep.subr.mxu0 0.0
  %339 = vmatpush1.msra.mxu0 0.0
  %340 = vmatprep.subr.mxu0 0.0
  %341 = vmatpush1.msra.mxu0 0.0
  %342 = vmatprep.subr.mxu0 0.0
  %343 = vmatpush1.msra.mxu0 0.0
  %344 = vmatprep.subr.mxu0 0.0
  %345 = vmatpush1.msra.mxu0 0.0
  %346 = vmatprep.subr.mxu0 0.0
  %347 = vmatpush1.msra.mxu0 0.0
  %348 = vmatprep.subr.mxu0 0.0
  %349 = vmatpush1.msra.mxu0 0.0
  %350 = vmatprep.subr.mxu0 0.0
  %351 = vmatpush1.msra.mxu0 0.0
  %352 = vmatprep.subr.mxu0 0.0
  %353 = vmatpush1.msra.mxu0 0.0
  %354 = vmatprep.subr.mxu0 0.0
  %355 = vmatpush1.msra.mxu0 %v38
  %356 = vmatprep.subr.mxu0 0.0
  %357 = vmatpush1.msra.mxu0 %v37
  %358 = vmatprep.subr.mxu0 0.0
  %359 = vmatpush1.msra.mxu0 %v36
  %360 = vmatprep.subr.mxu0 0.0
  %361 = vmatpush1.msra.mxu0 %v35
  %362 = vmatprep.subr.mxu0 0.0
  %363 = vmatpush2.msra.mxu0 0.0
  %364 = vmatprep.subr.mxu0 0.0
  %365 = vmatpush2.msra.mxu0 0.0
  %366 = vmatprep.subr.mxu0 0.0
  %367 = vmatpush2.msra.mxu0 0.0
  %368 = vmatprep.subr.mxu0 0.0
  %369 = vmatpush2.msra.mxu0 0.0
  %370 = vmatprep.subr.mxu0 0.0
  %371 = vmatpush2.msra.mxu0 0.0
  %372 = vmatprep.subr.mxu0 0.0
  %373 = vmatpush2.msra.mxu0 0.0
  %374 = vmatprep.subr.mxu0 0.0
  %375 = vmatpush2.msra.mxu0 0.0
  %376 = vmatprep.subr.mxu0 0.0
  %377 = vmatpush2.msra.mxu0 0.0
  %378 = vmatprep.subr.mxu0 0.0
  %379 = vmatpush2.msra.mxu0 0.0
  %380 = vmatprep.subr.mxu0 0.0
  %381 = vmatpush2.msra.mxu0 0.0
  %382 = vmatprep.subr.mxu0 0.0
  %383 = vmatpush2.msra.mxu0 0.0
  %384 = vmatprep.subr.mxu0 0.0
  %385 = vmatpush2.msra.mxu0 0.0
  %386 = vmatprep.subr.mxu0 0.0
  %387 = vmatpush2.msra.mxu0 0.0
  %388 = vmatprep.subr.mxu0 0.0
  %389 = vmatpush2.msra.mxu0 0.0
  %390 = vmatprep.subr.mxu0 0.0
  %391 = vmatpush2.msra.mxu0 0.0
  %392 = vmatprep.subr.mxu0 0.0
  %393 = vmatpush2.msra.mxu0 0.0
  %394 = vmatprep.mubr.f32.mxu0 0.0
  %395 = vmatmul.mubr.f32.gmra.mxu0 %v231
  %v396 = vpop.f32.mrf.mxu0
  %v397 = vadd.f32 0.0, %v396
  %v398 = vpop.f32.mrf.mxu0
  %399 = vdwg.mxu0
  %v400 = vadd.f32 %v329, %v397
  %402 = vrot.lane.b32.xlu0 %v327, 64
  %v403 = vpop.permute.xlu0 %402
  %v404 = vsel %vm56, %v403, 0
  %406 = vmatprep.subr.mxu0 0.0
  %407 = vmatpush1.msra.mxu0 0.0
  %408 = vmatprep.subr.mxu0 0.0
  %409 = vmatpush1.msra.mxu0 0.0
  %410 = vmatprep.subr.mxu0 0.0
  %411 = vmatpush1.msra.mxu0 0.0
  %412 = vmatprep.subr.mxu0 0.0
  %413 = vmatpush1.msra.mxu0 0.0
  %414 = vmatprep.subr.mxu0 0.0
  %415 = vmatpush1.msra.mxu0 0.0
  %416 = vmatprep.subr.mxu0 0.0
  %417 = vmatpush1.msra.mxu0 0.0
  %418 = vmatprep.subr.mxu0 0.0
  %419 = vmatpush1.msra.mxu0 0.0
  %420 = vmatprep.subr.mxu0 0.0
  %421 = vmatpush1.msra.mxu0 0.0
  %422 = vmatprep.subr.mxu0 0.0
  %423 = vmatpush1.msra.mxu0 0.0
  %424 = vmatprep.subr.mxu0 0.0
  %425 = vmatpush1.msra.mxu0 0.0
  %426 = vmatprep.subr.mxu0 0.0
  %427 = vmatpush1.msra.mxu0 0.0
  %428 = vmatprep.subr.mxu0 0.0
  %429 = vmatpush1.msra.mxu0 0.0
  %430 = vmatprep.subr.mxu0 0.0
  %431 = vmatpush1.msra.mxu0 %v46
  %432 = vmatprep.subr.mxu0 0.0
  %433 = vmatpush1.msra.mxu0 %v45
  %434 = vmatprep.subr.mxu0 0.0
  %435 = vmatpush1.msra.mxu0 %v44
  %436 = vmatprep.subr.mxu0 0.0
  %437 = vmatpush1.msra.mxu0 %v43
  %438 = vmatprep.subr.mxu0 0.0
  %439 = vmatpush2.msra.mxu0 0.0
  %440 = vmatprep.subr.mxu0 0.0
  %441 = vmatpush2.msra.mxu0 0.0
  %442 = vmatprep.subr.mxu0 0.0
  %443 = vmatpush2.msra.mxu0 0.0
  %444 = vmatprep.subr.mxu0 0.0
  %445 = vmatpush2.msra.mxu0 0.0
  %446 = vmatprep.subr.mxu0 0.0
  %447 = vmatpush2.msra.mxu0 0.0
  %448 = vmatprep.subr.mxu0 0.0
  %449 = vmatpush2.msra.mxu0 0.0
  %450 = vmatprep.subr.mxu0 0.0
  %451 = vmatpush2.msra.mxu0 0.0
  %452 = vmatprep.subr.mxu0 0.0
  %453 = vmatpush2.msra.mxu0 0.0
  %454 = vmatprep.subr.mxu0 0.0
  %455 = vmatpush2.msra.mxu0 0.0
  %456 = vmatprep.subr.mxu0 0.0
  %457 = vmatpush2.msra.mxu0 0.0
  %458 = vmatprep.subr.mxu0 0.0
  %459 = vmatpush2.msra.mxu0 0.0
  %460 = vmatprep.subr.mxu0 0.0
  %461 = vmatpush2.msra.mxu0 0.0
  %462 = vmatprep.subr.mxu0 0.0
  %463 = vmatpush2.msra.mxu0 0.0
  %464 = vmatprep.subr.mxu0 0.0
  %465 = vmatpush2.msra.mxu0 0.0
  %466 = vmatprep.subr.mxu0 0.0
  %467 = vmatpush2.msra.mxu0 0.0
  %468 = vmatprep.subr.mxu0 0.0
  %469 = vmatpush2.msra.mxu0 0.0
  %470 = vmatprep.mubr.f32.mxu0 0.0
  %471 = vmatmul.mubr.f32.gmra.mxu0 %v404
  %v472 = vpop.f32.mrf.mxu0
  %v473 = vadd.f32 %v52, %v472
  %v474 = vpop.f32.mrf.mxu0
  %475 = vdwg.mxu0
  %v476 = vmul.f32 %v400, 0.5
  %v477 = vtanh.pop %v476
  %v478 = vmul.f32 %v477, 0.5
  %v479 = vadd.f32 %v478, 0.5
  %v480 = vtanh.pop %v400
  %v481 = vmul.f32 %v479, %v221
  %483 = vrot.lane.b32.xlu0 %v480, 32
  %v484 = vpop.permute.xlu0 %483
  %v486 = vmul.f32 %v479, %v484
  %488 = vrot.lane.b32.xlu0 %v486, 32
  %v489 = vpop.permute.xlu0 %488
  %v491 = vadd.f32 %v481, %v489
  %v492 = vtanh.pop %v491
  %494 = vrot.lane.b32.xlu0 %v492, 32
  %v495 = vpop.permute.xlu0 %494
  %v497 = vmul.f32 %v479, %v495
  %499 = vrot.lane.b32.xlu0 %v497, 64
  %v500 = vpop.permute.xlu0 %499
  %v501 = vsel %vm56, %v500, 0
  %503 = vmatprep.subr.mxu0 0.0
  %504 = vmatpush1.msra.mxu0 0.0
  %505 = vmatprep.subr.mxu0 0.0
  %506 = vmatpush1.msra.mxu0 0.0
  %507 = vmatprep.subr.mxu0 0.0
  %508 = vmatpush1.msra.mxu0 0.0
  %509 = vmatprep.subr.mxu0 0.0
  %510 = vmatpush1.msra.mxu0 0.0
  %511 = vmatprep.subr.mxu0 0.0
  %512 = vmatpush1.msra.mxu0 0.0
  %513 = vmatprep.subr.mxu0 0.0
  %514 = vmatpush1.msra.mxu0 0.0
  %515 = vmatprep.subr.mxu0 0.0
  %516 = vmatpush1.msra.mxu0 0.0
  %517 = vmatprep.subr.mxu0 0.0
  %518 = vmatpush1.msra.mxu0 0.0
  %519 = vmatprep.subr.mxu0 0.0
  %520 = vmatpush1.msra.mxu0 0.0
  %521 = vmatprep.subr.mxu0 0.0
  %522 = vmatpush1.msra.mxu0 0.0
  %523 = vmatprep.subr.mxu0 0.0
  %524 = vmatpush1.msra.mxu0 0.0
  %525 = vmatprep.subr.mxu0 0.0
  %526 = vmatpush1.msra.mxu0 0.0
  %527 = vmatprep.subr.mxu0 0.0
  %528 = vmatpush1.msra.mxu0 %v42
  %529 = vmatprep.subr.mxu0 0.0
  %530 = vmatpush1.msra.mxu0 %v41
  %531 = vmatprep.subr.mxu0 0.0
  %532 = vmatpush1.msra.mxu0 %v40
  %533 = vmatprep.subr.mxu0 0.0
  %534 = vmatpush1.msra.mxu0 %v39
  %535 = vmatprep.subr.mxu0 0.0
  %536 = vmatpush2.msra.mxu0 0.0
  %537 = vmatprep.subr.mxu0 0.0
  %538 = vmatpush2.msra.mxu0 0.0
  %539 = vmatprep.subr.mxu0 0.0
  %540 = vmatpush2.msra.mxu0 0.0
  %541 = vmatprep.subr.mxu0 0.0
  %542 = vmatpush2.msra.mxu0 0.0
  %543 = vmatprep.subr.mxu0 0.0
  %544 = vmatpush2.msra.mxu0 0.0
  %545 = vmatprep.subr.mxu0 0.0
  %546 = vmatpush2.msra.mxu0 0.0
  %547 = vmatprep.subr.mxu0 0.0
  %548 = vmatpush2.msra.mxu0 0.0
  %549 = vmatprep.subr.mxu0 0.0
  %550 = vmatpush2.msra.mxu0 0.0
  %551 = vmatprep.subr.mxu0 0.0
  %552 = vmatpush2.msra.mxu0 0.0
  %553 = vmatprep.subr.mxu0 0.0
  %554 = vmatpush2.msra.mxu0 0.0
  %555 = vmatprep.subr.mxu0 0.0
  %556 = vmatpush2.msra.mxu0 0.0
  %557 = vmatprep.subr.mxu0 0.0
  %558 = vmatpush2.msra.mxu0 0.0
  %559 = vmatprep.subr.mxu0 0.0
  %560 = vmatpush2.msra.mxu0 0.0
  %561 = vmatprep.subr.mxu0 0.0
  %562 = vmatpush2.msra.mxu0 0.0
  %563 = vmatprep.subr.mxu0 0.0
  %564 = vmatpush2.msra.mxu0 0.0
  %565 = vmatprep.subr.mxu0 0.0
  %566 = vmatpush2.msra.mxu0 0.0
  %567 = vmatprep.mubr.f32.mxu0 0.0
  %568 = vmatmul.mubr.f32.gmra.mxu0 %v501
  %v569 = vpop.f32.mrf.mxu0
  %v570 = vadd.f32 %v473, %v569
  %v571 = vpop.f32.mrf.mxu0
  %572 = vdwg.mxu0
  %v573 = vmul.f32 %v570, 0.5
  %v574 = vtanh.pop %v573
  %v575 = vmul.f32 %v574, 0.5
  %v576 = vadd.f32 %v575, 0.5
  %v577 = vtanh.pop %v570
  %v578 = vmul.f32 %v576, %v321
  %580 = vrot.lane.b32.xlu0 %v577, 32
  %v581 = vpop.permute.xlu0 %580
  %v583 = vmul.f32 %v576, %v581
  %585 = vrot.lane.b32.xlu0 %v583, 32
  %v586 = vpop.permute.xlu0 %585
  %v588 = vadd.f32 %v578, %v586
  %v589 = vtanh.pop %v588
  %591 = vrot.lane.b32.xlu0 %v589, 32
  %v592 = vpop.permute.xlu0 %591
  %v594 = vmul.f32 %v576, %v592
  %s595 = scalar_lea.vmem %s0, 16
  %v596 = vld [vmem:[%s595] sm:$0xff]
  %597 = vmatprep.subr.mxu0 0.0
  %598 = vmatpush1.msra.mxu0 0.0
  %599 = vmatprep.subr.mxu0 0.0
  %600 = vmatpush1.msra.mxu0 0.0
  %601 = vmatprep.subr.mxu0 0.0
  %602 = vmatpush1.msra.mxu0 0.0
  %603 = vmatprep.subr.mxu0 0.0
  %604 = vmatpush1.msra.mxu0 0.0
  %605 = vmatprep.subr.mxu0 0.0
  %606 = vmatpush1.msra.mxu0 0.0
  %607 = vmatprep.subr.mxu0 0.0
  %608 = vmatpush1.msra.mxu0 0.0
  %609 = vmatprep.subr.mxu0 0.0
  %610 = vmatpush1.msra.mxu0 0.0
  %611 = vmatprep.subr.mxu0 0.0
  %612 = vmatpush1.msra.mxu0 0.0
  %613 = vmatprep.subr.mxu0 0.0
  %614 = vmatpush1.msra.mxu0 0.0
  %615 = vmatprep.subr.mxu0 0.0
  %616 = vmatpush1.msra.mxu0 0.0
  %617 = vmatprep.subr.mxu0 0.0
  %618 = vmatpush1.msra.mxu0 0.0
  %619 = vmatprep.subr.mxu0 0.0
  %620 = vmatpush1.msra.mxu0 0.0
  %621 = vmatprep.subr.mxu0 0.0
  %622 = vmatpush1.msra.mxu0 %v38
  %623 = vmatprep.subr.mxu0 0.0
  %624 = vmatpush1.msra.mxu0 %v37
  %625 = vmatprep.subr.mxu0 0.0
  %626 = vmatpush1.msra.mxu0 %v36
  %627 = vmatprep.subr.mxu0 0.0
  %628 = vmatpush1.msra.mxu0 %v35
  %629 = vmatprep.subr.mxu0 0.0
  %630 = vmatpush2.msra.mxu0 0.0
  %631 = vmatprep.subr.mxu0 0.0
  %632 = vmatpush2.msra.mxu0 0.0
  %633 = vmatprep.subr.mxu0 0.0
  %634 = vmatpush2.msra.mxu0 0.0
  %635 = vmatprep.subr.mxu0 0.0
  %636 = vmatpush2.msra.mxu0 0.0
  %637 = vmatprep.subr.mxu0 0.0
  %638 = vmatpush2.msra.mxu0 0.0
  %639 = vmatprep.subr.mxu0 0.0
  %640 = vmatpush2.msra.mxu0 0.0
  %641 = vmatprep.subr.mxu0 0.0
  %642 = vmatpush2.msra.mxu0 0.0
  %643 = vmatprep.subr.mxu0 0.0
  %644 = vmatpush2.msra.mxu0 0.0
  %645 = vmatprep.subr.mxu0 0.0
  %646 = vmatpush2.msra.mxu0 0.0
  %647 = vmatprep.subr.mxu0 0.0
  %648 = vmatpush2.msra.mxu0 0.0
  %649 = vmatprep.subr.mxu0 0.0
  %650 = vmatpush2.msra.mxu0 0.0
  %651 = vmatprep.subr.mxu0 0.0
  %652 = vmatpush2.msra.mxu0 0.0
  %653 = vmatprep.subr.mxu0 0.0
  %654 = vmatpush2.msra.mxu0 0.0
  %655 = vmatprep.subr.mxu0 0.0
  %656 = vmatpush2.msra.mxu0 0.0
  %657 = vmatprep.subr.mxu0 0.0
  %658 = vmatpush2.msra.mxu0 0.0
  %659 = vmatprep.subr.mxu0 0.0
  %660 = vmatpush2.msra.mxu0 0.0
  %661 = vmatprep.mubr.f32.mxu0 0.0
  %662 = vmatmul.mubr.f32.gmra.mxu0 %v501
  %v663 = vpop.f32.mrf.mxu0
  %v664 = vadd.f32 0.0, %v663
  %v665 = vpop.f32.mrf.mxu0
  %666 = vdwg.mxu0
  %v667 = vadd.f32 %v596, %v664
  %669 = vrot.lane.b32.xlu0 %v594, 64
  %v670 = vpop.permute.xlu0 %669
  %v671 = vsel %vm56, %v670, 0
  %673 = vmatprep.subr.mxu0 0.0
  %674 = vmatpush1.msra.mxu0 0.0
  %675 = vmatprep.subr.mxu0 0.0
  %676 = vmatpush1.msra.mxu0 0.0
  %677 = vmatprep.subr.mxu0 0.0
  %678 = vmatpush1.msra.mxu0 0.0
  %679 = vmatprep.subr.mxu0 0.0
  %680 = vmatpush1.msra.mxu0 0.0
  %681 = vmatprep.subr.mxu0 0.0
  %682 = vmatpush1.msra.mxu0 0.0
  %683 = vmatprep.subr.mxu0 0.0
  %684 = vmatpush1.msra.mxu0 0.0
  %685 = vmatprep.subr.mxu0 0.0
  %686 = vmatpush1.msra.mxu0 0.0
  %687 = vmatprep.subr.mxu0 0.0
  %688 = vmatpush1.msra.mxu0 0.0
  %689 = vmatprep.subr.mxu0 0.0
  %690 = vmatpush1.msra.mxu0 0.0
  %691 = vmatprep.subr.mxu0 0.0
  %692 = vmatpush1.msra.mxu0 0.0
  %693 = vmatprep.subr.mxu0 0.0
  %694 = vmatpush1.msra.mxu0 0.0
  %695 = vmatprep.subr.mxu0 0.0
  %696 = vmatpush1.msra.mxu0 0.0
  %697 = vmatprep.subr.mxu0 0.0
  %698 = vmatpush1.msra.mxu0 %v46
  %699 = vmatprep.subr.mxu0 0.0
  %700 = vmatpush1.msra.mxu0 %v45
  %701 = vmatprep.subr.mxu0 0.0
  %702 = vmatpush1.msra.mxu0 %v44
  %703 = vmatprep.subr.mxu0 0.0
  %704 = vmatpush1.msra.mxu0 %v43
  %705 = vmatprep.subr.mxu0 0.0
  %706 = vmatpush2.msra.mxu0 0.0
  %707 = vmatprep.subr.mxu0 0.0
  %708 = vmatpush2.msra.mxu0 0.0
  %709 = vmatprep.subr.mxu0 0.0
  %710 = vmatpush2.msra.mxu0 0.0
  %711 = vmatprep.subr.mxu0 0.0
  %712 = vmatpush2.msra.mxu0 0.0
  %713 = vmatprep.subr.mxu0 0.0
  %714 = vmatpush2.msra.mxu0 0.0
  %715 = vmatprep.subr.mxu0 0.0
  %716 = vmatpush2.msra.mxu0 0.0
  %717 = vmatprep.subr.mxu0 0.0
  %718 = vmatpush2.msra.mxu0 0.0
  %719 = vmatprep.subr.mxu0 0.0
  %720 = vmatpush2.msra.mxu0 0.0
  %721 = vmatprep.subr.mxu0 0.0
  %722 = vmatpush2.msra.mxu0 0.0
  %723 = vmatprep.subr.mxu0 0.0
  %724 = vmatpush2.msra.mxu0 0.0
  %725 = vmatprep.subr.mxu0 0.0
  %726 = vmatpush2.msra.mxu0 0.0
  %727 = vmatprep.subr.mxu0 0.0
  %728 = vmatpush2.msra.mxu0 0.0
  %729 = vmatprep.subr.mxu0 0.0
  %730 = vmatpush2.msra.mxu0 0.0
  %731 = vmatprep.subr.mxu0 0.0
  %732 = vmatpush2.msra.mxu0 0.0
  %733 = vmatprep.subr.mxu0 0.0
  %734 = vmatpush2.msra.mxu0 0.0
  %735 = vmatprep.subr.mxu0 0.0
  %736 = vmatpush2.msra.mxu0 0.0
  %737 = vmatprep.mubr.f32.mxu0 0.0
  %738 = vmatmul.mubr.f32.gmra.mxu0 %v671
  %v739 = vpop.f32.mrf.mxu0
  %v740 = vadd.f32 %v52, %v739
  %v741 = vpop.f32.mrf.mxu0
  %742 = vdwg.mxu0
  %v743 = vmul.f32 %v667, 0.5
  %v744 = vtanh.pop %v743
  %v745 = vmul.f32 %v744, 0.5
  %v746 = vadd.f32 %v745, 0.5
  %v747 = vtanh.pop %v667
  %v748 = vmul.f32 %v746, %v491
  %750 = vrot.lane.b32.xlu0 %v747, 32
  %v751 = vpop.permute.xlu0 %750
  %v753 = vmul.f32 %v746, %v751
  %755 = vrot.lane.b32.xlu0 %v753, 32
  %v756 = vpop.permute.xlu0 %755
  %v758 = vadd.f32 %v748, %v756
  %v759 = vtanh.pop %v758
  %761 = vrot.lane.b32.xlu0 %v759, 32
  %v762 = vpop.permute.xlu0 %761
  %v764 = vmul.f32 %v746, %v762
  %766 = vrot.lane.b32.xlu0 %v764, 64
  %v767 = vpop.permute.xlu0 %766
  %v768 = vsel %vm56, %v767, 0
  %770 = vmatprep.subr.mxu0 0.0
  %771 = vmatpush1.msra.mxu0 0.0
  %772 = vmatprep.subr.mxu0 0.0
  %773 = vmatpush1.msra.mxu0 0.0
  %774 = vmatprep.subr.mxu0 0.0
  %775 = vmatpush1.msra.mxu0 0.0
  %776 = vmatprep.subr.mxu0 0.0
  %777 = vmatpush1.msra.mxu0 0.0
  %778 = vmatprep.subr.mxu0 0.0
  %779 = vmatpush1.msra.mxu0 0.0
  %780 = vmatprep.subr.mxu0 0.0
  %781 = vmatpush1.msra.mxu0 0.0
  %782 = vmatprep.subr.mxu0 0.0
  %783 = vmatpush1.msra.mxu0 0.0
  %784 = vmatprep.subr.mxu0 0.0
  %785 = vmatpush1.msra.mxu0 0.0
  %786 = vmatprep.subr.mxu0 0.0
  %787 = vmatpush1.msra.mxu0 0.0
  %788 = vmatprep.subr.mxu0 0.0
  %789 = vmatpush1.msra.mxu0 0.0
  %790 = vmatprep.subr.mxu0 0.0
  %791 = vmatpush1.msra.mxu0 0.0
  %792 = vmatprep.subr.mxu0 0.0
  %793 = vmatpush1.msra.mxu0 0.0
  %794 = vmatprep.subr.mxu0 0.0
  %795 = vmatpush1.msra.mxu0 %v42
  %796 = vmatprep.subr.mxu0 0.0
  %797 = vmatpush1.msra.mxu0 %v41
  %798 = vmatprep.subr.mxu0 0.0
  %799 = vmatpush1.msra.mxu0 %v40
  %800 = vmatprep.subr.mxu0 0.0
  %801 = vmatpush1.msra.mxu0 %v39
  %802 = vmatprep.subr.mxu0 0.0
  %803 = vmatpush2.msra.mxu0 0.0
  %804 = vmatprep.subr.mxu0 0.0
  %805 = vmatpush2.msra.mxu0 0.0
  %806 = vmatprep.subr.mxu0 0.0
  %807 = vmatpush2.msra.mxu0 0.0
  %808 = vmatprep.subr.mxu0 0.0
  %809 = vmatpush2.msra.mxu0 0.0
  %810 = vmatprep.subr.mxu0 0.0
  %811 = vmatpush2.msra.mxu0 0.0
  %812 = vmatprep.subr.mxu0 0.0
  %813 = vmatpush2.msra.mxu0 0.0
  %814 = vmatprep.subr.mxu0 0.0
  %815 = vmatpush2.msra.mxu0 0.0
  %816 = vmatprep.subr.mxu0 0.0
  %817 = vmatpush2.msra.mxu0 0.0
  %818 = vmatprep.subr.mxu0 0.0
  %819 = vmatpush2.msra.mxu0 0.0
  %820 = vmatprep.subr.mxu0 0.0
  %821 = vmatpush2.msra.mxu0 0.0
  %822 = vmatprep.subr.mxu0 0.0
  %823 = vmatpush2.msra.mxu0 0.0
  %824 = vmatprep.subr.mxu0 0.0
  %825 = vmatpush2.msra.mxu0 0.0
  %826 = vmatprep.subr.mxu0 0.0
  %827 = vmatpush2.msra.mxu0 0.0
  %828 = vmatprep.subr.mxu0 0.0
  %829 = vmatpush2.msra.mxu0 0.0
  %830 = vmatprep.subr.mxu0 0.0
  %831 = vmatpush2.msra.mxu0 0.0
  %832 = vmatprep.subr.mxu0 0.0
  %833 = vmatpush2.msra.mxu0 0.0
  %834 = vmatprep.mubr.f32.mxu0 0.0
  %835 = vmatmul.mubr.f32.gmra.mxu0 %v768
  %v836 = vpop.f32.mrf.mxu0
  %v837 = vadd.f32 %v740, %v836
  %v838 = vpop.f32.mrf.mxu0
  %839 = vdwg.mxu0
  %v840 = vmul.f32 %v837, 0.5
  %v841 = vtanh.pop %v840
  %v842 = vmul.f32 %v841, 0.5
  %v843 = vadd.f32 %v842, 0.5
  %v844 = vtanh.pop %v837
  %v845 = vmul.f32 %v843, %v588
  %847 = vrot.lane.b32.xlu0 %v844, 32
  %v848 = vpop.permute.xlu0 %847
  %v850 = vmul.f32 %v843, %v848
  %852 = vrot.lane.b32.xlu0 %v850, 32
  %v853 = vpop.permute.xlu0 %852
  %v855 = vadd.f32 %v845, %v853
  %v856 = vtanh.pop %v855
  %858 = vrot.lane.b32.xlu0 %v856, 32
  %v859 = vpop.permute.xlu0 %858
  %v861 = vmul.f32 %v843, %v859
  %s862 = scalar_lea.vmem %s0, 24
  %v863 = vld [vmem:[%s862] sm:$0xff]
  %864 = vmatprep.subr.mxu0 0.0
  %865 = vmatpush1.msra.mxu0 0.0
  %866 = vmatprep.subr.mxu0 0.0
  %867 = vmatpush1.msra.mxu0 0.0
  %868 = vmatprep.subr.mxu0 0.0
  %869 = vmatpush1.msra.mxu0 0.0
  %870 = vmatprep.subr.mxu0 0.0
  %871 = vmatpush1.msra.mxu0 0.0
  %872 = vmatprep.subr.mxu0 0.0
  %873 = vmatpush1.msra.mxu0 0.0
  %874 = vmatprep.subr.mxu0 0.0
  %875 = vmatpush1.msra.mxu0 0.0
  %876 = vmatprep.subr.mxu0 0.0
  %877 = vmatpush1.msra.mxu0 0.0
  %878 = vmatprep.subr.mxu0 0.0
  %879 = vmatpush1.msra.mxu0 0.0
  %880 = vmatprep.subr.mxu0 0.0
  %881 = vmatpush1.msra.mxu0 0.0
  %882 = vmatprep.subr.mxu0 0.0
  %883 = vmatpush1.msra.mxu0 0.0
  %884 = vmatprep.subr.mxu0 0.0
  %885 = vmatpush1.msra.mxu0 0.0
  %886 = vmatprep.subr.mxu0 0.0
  %887 = vmatpush1.msra.mxu0 0.0
  %888 = vmatprep.subr.mxu0 0.0
  %889 = vmatpush1.msra.mxu0 %v38
  %890 = vmatprep.subr.mxu0 0.0
  %891 = vmatpush1.msra.mxu0 %v37
  %892 = vmatprep.subr.mxu0 0.0
  %893 = vmatpush1.msra.mxu0 %v36
  %894 = vmatprep.subr.mxu0 0.0
  %895 = vmatpush1.msra.mxu0 %v35
  %896 = vmatprep.subr.mxu0 0.0
  %897 = vmatpush2.msra.mxu0 0.0
  %898 = vmatprep.subr.mxu0 0.0
  %899 = vmatpush2.msra.mxu0 0.0
  %900 = vmatprep.subr.mxu0 0.0
  %901 = vmatpush2.msra.mxu0 0.0
  %902 = vmatprep.subr.mxu0 0.0
  %903 = vmatpush2.msra.mxu0 0.0
  %904 = vmatprep.subr.mxu0 0.0
  %905 = vmatpush2.msra.mxu0 0.0
  %906 = vmatprep.subr.mxu0 0.0
  %907 = vmatpush2.msra.mxu0 0.0
  %908 = vmatprep.subr.mxu0 0.0
  %909 = vmatpush2.msra.mxu0 0.0
  %910 = vmatprep.subr.mxu0 0.0
  %911 = vmatpush2.msra.mxu0 0.0
  %912 = vmatprep.subr.mxu0 0.0
  %913 = vmatpush2.msra.mxu0 0.0
  %914 = vmatprep.subr.mxu0 0.0
  %915 = vmatpush2.msra.mxu0 0.0
  %916 = vmatprep.subr.mxu0 0.0
  %917 = vmatpush2.msra.mxu0 0.0
  %918 = vmatprep.subr.mxu0 0.0
  %919 = vmatpush2.msra.mxu0 0.0
  %920 = vmatprep.subr.mxu0 0.0
  %921 = vmatpush2.msra.mxu0 0.0
  %922 = vmatprep.subr.mxu0 0.0
  %923 = vmatpush2.msra.mxu0 0.0
  %924 = vmatprep.subr.mxu0 0.0
  %925 = vmatpush2.msra.mxu0 0.0
  %926 = vmatprep.subr.mxu0 0.0
  %927 = vmatpush2.msra.mxu0 0.0
  %928 = vmatprep.mubr.f32.mxu0 0.0
  %929 = vmatmul.mubr.f32.gmra.mxu0 %v768
  %v930 = vpop.f32.mrf.mxu0
  %v931 = vadd.f32 0.0, %v930
  %v932 = vpop.f32.mrf.mxu0
  %933 = vdwg.mxu0
  %v934 = vadd.f32 %v863, %v931
  %936 = vrot.lane.b32.xlu0 %v861, 64
  %v937 = vpop.permute.xlu0 %936
  %v938 = vsel %vm56, %v937, 0
  %940 = vmatprep.subr.mxu0 0.0
  %941 = vmatpush1.msra.mxu0 0.0
  %942 = vmatprep.subr.mxu0 0.0
  %943 = vmatpush1.msra.mxu0 0.0
  %944 = vmatprep.subr.mxu0 0.0
  %945 = vmatpush1.msra.mxu0 0.0
  %946 = vmatprep.subr.mxu0 0.0
  %947 = vmatpush1.msra.mxu0 0.0
  %948 = vmatprep.subr.mxu0 0.0
  %949 = vmatpush1.msra.mxu0 0.0
  %950 = vmatprep.subr.mxu0 0.0
  %951 = vmatpush1.msra.mxu0 0.0
  %952 = vmatprep.subr.mxu0 0.0
  %953 = vmatpush1.msra.mxu0 0.0
  %954 = vmatprep.subr.mxu0 0.0
  %955 = vmatpush1.msra.mxu0 0.0
  %956 = vmatprep.subr.mxu0 0.0
  %957 = vmatpush1.msra.mxu0 0.0
  %958 = vmatprep.subr.mxu0 0.0
  %959 = vmatpush1.msra.mxu0 0.0
  %960 = vmatprep.subr.mxu0 0.0
  %961 = vmatpush1.msra.mxu0 0.0
  %962 = vmatprep.subr.mxu0 0.0
  %963 = vmatpush1.msra.mxu0 0.0
  %964 = vmatprep.subr.mxu0 0.0
  %965 = vmatpush1.msra.mxu0 %v46
  %966 = vmatprep.subr.mxu0 0.0
  %967 = vmatpush1.msra.mxu0 %v45
  %968 = vmatprep.subr.mxu0 0.0
  %969 = vmatpush1.msra.mxu0 %v44
  %970 = vmatprep.subr.mxu0 0.0
  %971 = vmatpush1.msra.mxu0 %v43
  %972 = vmatprep.subr.mxu0 0.0
  %973 = vmatpush2.msra.mxu0 0.0
  %974 = vmatprep.subr.mxu0 0.0
  %975 = vmatpush2.msra.mxu0 0.0
  %976 = vmatprep.subr.mxu0 0.0
  %977 = vmatpush2.msra.mxu0 0.0
  %978 = vmatprep.subr.mxu0 0.0
  %979 = vmatpush2.msra.mxu0 0.0
  %980 = vmatprep.subr.mxu0 0.0
  %981 = vmatpush2.msra.mxu0 0.0
  %982 = vmatprep.subr.mxu0 0.0
  %983 = vmatpush2.msra.mxu0 0.0
  %984 = vmatprep.subr.mxu0 0.0
  %985 = vmatpush2.msra.mxu0 0.0
  %986 = vmatprep.subr.mxu0 0.0
  %987 = vmatpush2.msra.mxu0 0.0
  %988 = vmatprep.subr.mxu0 0.0
  %989 = vmatpush2.msra.mxu0 0.0
  %990 = vmatprep.subr.mxu0 0.0
  %991 = vmatpush2.msra.mxu0 0.0
  %992 = vmatprep.subr.mxu0 0.0
  %993 = vmatpush2.msra.mxu0 0.0
  %994 = vmatprep.subr.mxu0 0.0
  %995 = vmatpush2.msra.mxu0 0.0
  %996 = vmatprep.subr.mxu0 0.0
  %997 = vmatpush2.msra.mxu0 0.0
  %998 = vmatprep.subr.mxu0 0.0
  %999 = vmatpush2.msra.mxu0 0.0
  %1000 = vmatprep.subr.mxu0 0.0
  %1001 = vmatpush2.msra.mxu0 0.0
  %1002 = vmatprep.subr.mxu0 0.0
  %1003 = vmatpush2.msra.mxu0 0.0
  %1004 = vmatprep.mubr.f32.mxu0 0.0
  %1005 = vmatmul.mubr.f32.gmra.mxu0 %v938
  %v1006 = vpop.f32.mrf.mxu0
  %v1007 = vadd.f32 %v52, %v1006
  %v1008 = vpop.f32.mrf.mxu0
  %1009 = vdwg.mxu0
  %v1010 = vmul.f32 %v934, 0.5
  %v1011 = vtanh.pop %v1010
  %v1012 = vmul.f32 %v1011, 0.5
  %v1013 = vadd.f32 %v1012, 0.5
  %v1014 = vtanh.pop %v934
  %v1015 = vmul.f32 %v1013, %v758
  %1017 = vrot.lane.b32.xlu0 %v1014, 32
  %v1018 = vpop.permute.xlu0 %1017
  %v1020 = vmul.f32 %v1013, %v1018
  %1022 = vrot.lane.b32.xlu0 %v1020, 32
  %v1023 = vpop.permute.xlu0 %1022
  %v1025 = vadd.f32 %v1015, %v1023
  %v1026 = vtanh.pop %v1025
  %1028 = vrot.lane.b32.xlu0 %v1026, 32
  %v1029 = vpop.permute.xlu0 %1028
  %v1031 = vmul.f32 %v1013, %v1029
  %1033 = vrot.lane.b32.xlu0 %v1031, 64
  %v1034 = vpop.permute.xlu0 %1033
  %v1035 = vsel %vm56, %v1034, 0
  %1037 = vmatprep.subr.mxu0 0.0
  %1038 = vmatpush1.msra.mxu0 0.0
  %1039 = vmatprep.subr.mxu0 0.0
  %1040 = vmatpush1.msra.mxu0 0.0
  %1041 = vmatprep.subr.mxu0 0.0
  %1042 = vmatpush1.msra.mxu0 0.0
  %1043 = vmatprep.subr.mxu0 0.0
  %1044 = vmatpush1.msra.mxu0 0.0
  %1045 = vmatprep.subr.mxu0 0.0
  %1046 = vmatpush1.msra.mxu0 0.0
  %1047 = vmatprep.subr.mxu0 0.0
  %1048 = vmatpush1.msra.mxu0 0.0
  %1049 = vmatprep.subr.mxu0 0.0
  %1050 = vmatpush1.msra.mxu0 0.0
  %1051 = vmatprep.subr.mxu0 0.0
  %1052 = vmatpush1.msra.mxu0 0.0
  %1053 = vmatprep.subr.mxu0 0.0
  %1054 = vmatpush1.msra.mxu0 0.0
  %1055 = vmatprep.subr.mxu0 0.0
  %1056 = vmatpush1.msra.mxu0 0.0
  %1057 = vmatprep.subr.mxu0 0.0
  %1058 = vmatpush1.msra.mxu0 0.0
  %1059 = vmatprep.subr.mxu0 0.0
  %1060 = vmatpush1.msra.mxu0 0.0
  %1061 = vmatprep.subr.mxu0 0.0
  %1062 = vmatpush1.msra.mxu0 %v42
  %1063 = vmatprep.subr.mxu0 0.0
  %1064 = vmatpush1.msra.mxu0 %v41
  %1065 = vmatprep.subr.mxu0 0.0
  %1066 = vmatpush1.msra.mxu0 %v40
  %1067 = vmatprep.subr.mxu0 0.0
  %1068 = vmatpush1.msra.mxu0 %v39
  %1069 = vmatprep.subr.mxu0 0.0
  %1070 = vmatpush2.msra.mxu0 0.0
  %1071 = vmatprep.subr.mxu0 0.0
  %1072 = vmatpush2.msra.mxu0 0.0
  %1073 = vmatprep.subr.mxu0 0.0
  %1074 = vmatpush2.msra.mxu0 0.0
  %1075 = vmatprep.subr.mxu0 0.0
  %1076 = vmatpush2.msra.mxu0 0.0
  %1077 = vmatprep.subr.mxu0 0.0
  %1078 = vmatpush2.msra.mxu0 0.0
  %1079 = vmatprep.subr.mxu0 0.0
  %1080 = vmatpush2.msra.mxu0 0.0
  %1081 = vmatprep.subr.mxu0 0.0
  %1082 = vmatpush2.msra.mxu0 0.0
  %1083 = vmatprep.subr.mxu0 0.0
  %1084 = vmatpush2.msra.mxu0 0.0
  %1085 = vmatprep.subr.mxu0 0.0
  %1086 = vmatpush2.msra.mxu0 0.0
  %1087 = vmatprep.subr.mxu0 0.0
  %1088 = vmatpush2.msra.mxu0 0.0
  %1089 = vmatprep.subr.mxu0 0.0
  %1090 = vmatpush2.msra.mxu0 0.0
  %1091 = vmatprep.subr.mxu0 0.0
  %1092 = vmatpush2.msra.mxu0 0.0
  %1093 = vmatprep.subr.mxu0 0.0
  %1094 = vmatpush2.msra.mxu0 0.0
  %1095 = vmatprep.subr.mxu0 0.0
  %1096 = vmatpush2.msra.mxu0 0.0
  %1097 = vmatprep.subr.mxu0 0.0
  %1098 = vmatpush2.msra.mxu0 0.0
  %1099 = vmatprep.subr.mxu0 0.0
  %1100 = vmatpush2.msra.mxu0 0.0
  %1101 = vmatprep.mubr.f32.mxu0 0.0
  %1102 = vmatmul.mubr.f32.gmra.mxu0 %v1035
  %v1103 = vpop.f32.mrf.mxu0
  %v1104 = vadd.f32 %v1007, %v1103
  %v1105 = vpop.f32.mrf.mxu0
  %1106 = vdwg.mxu0
  %v1107 = vmul.f32 %v1104, 0.5
  %v1108 = vtanh.pop %v1107
  %v1109 = vmul.f32 %v1108, 0.5
  %v1110 = vadd.f32 %v1109, 0.5
  %v1111 = vtanh.pop %v1104
  %v1112 = vmul.f32 %v1110, %v855
  %1114 = vrot.lane.b32.xlu0 %v1111, 32
  %v1115 = vpop.permute.xlu0 %1114
  %v1117 = vmul.f32 %v1110, %v1115
  %1119 = vrot.lane.b32.xlu0 %v1117, 32
  %v1120 = vpop.permute.xlu0 %1119
  %v1122 = vadd.f32 %v1112, %v1120
  %v1123 = vtanh.pop %v1122
  %1125 = vrot.lane.b32.xlu0 %v1123, 32
  %v1126 = vpop.permute.xlu0 %1125
  %v1128 = vmul.f32 %v1110, %v1126
  %s1129 = scalar_lea.vmem %s0, 32
  %v1130 = vld [vmem:[%s1129] sm:$0xff]
  %1131 = vmatprep.subr.mxu0 0.0
  %1132 = vmatpush1.msra.mxu0 0.0
  %1133 = vmatprep.subr.mxu0 0.0
  %1134 = vmatpush1.msra.mxu0 0.0
  %1135 = vmatprep.subr.mxu0 0.0
  %1136 = vmatpush1.msra.mxu0 0.0
  %1137 = vmatprep.subr.mxu0 0.0
  %1138 = vmatpush1.msra.mxu0 0.0
  %1139 = vmatprep.subr.mxu0 0.0
  %1140 = vmatpush1.msra.mxu0 0.0
  %1141 = vmatprep.subr.mxu0 0.0
  %1142 = vmatpush1.msra.mxu0 0.0
  %1143 = vmatprep.subr.mxu0 0.0
  %1144 = vmatpush1.msra.mxu0 0.0
  %1145 = vmatprep.subr.mxu0 0.0
  %1146 = vmatpush1.msra.mxu0 0.0
  %1147 = vmatprep.subr.mxu0 0.0
  %1148 = vmatpush1.msra.mxu0 0.0
  %1149 = vmatprep.subr.mxu0 0.0
  %1150 = vmatpush1.msra.mxu0 0.0
  %1151 = vmatprep.subr.mxu0 0.0
  %1152 = vmatpush1.msra.mxu0 0.0
  %1153 = vmatprep.subr.mxu0 0.0
  %1154 = vmatpush1.msra.mxu0 0.0
  %1155 = vmatprep.subr.mxu0 0.0
  %1156 = vmatpush1.msra.mxu0 %v38
  %1157 = vmatprep.subr.mxu0 0.0
  %1158 = vmatpush1.msra.mxu0 %v37
  %1159 = vmatprep.subr.mxu0 0.0
  %1160 = vmatpush1.msra.mxu0 %v36
  %1161 = vmatprep.subr.mxu0 0.0
  %1162 = vmatpush1.msra.mxu0 %v35
  %1163 = vmatprep.subr.mxu0 0.0
  %1164 = vmatpush2.msra.mxu0 0.0
  %1165 = vmatprep.subr.mxu0 0.0
  %1166 = vmatpush2.msra.mxu0 0.0
  %1167 = vmatprep.subr.mxu0 0.0
  %1168 = vmatpush2.msra.mxu0 0.0
  %1169 = vmatprep.subr.mxu0 0.0
  %1170 = vmatpush2.msra.mxu0 0.0
  %1171 = vmatprep.subr.mxu0 0.0
  %1172 = vmatpush2.msra.mxu0 0.0
  %1173 = vmatprep.subr.mxu0 0.0
  %1174 = vmatpush2.msra.mxu0 0.0
  %1175 = vmatprep.subr.mxu0 0.0
  %1176 = vmatpush2.msra.mxu0 0.0
  %1177 = vmatprep.subr.mxu0 0.0
  %1178 = vmatpush2.msra.mxu0 0.0
  %1179 = vmatprep.subr.mxu0 0.0
  %1180 = vmatpush2.msra.mxu0 0.0
  %1181 = vmatprep.subr.mxu0 0.0
  %1182 = vmatpush2.msra.mxu0 0.0
  %1183 = vmatprep.subr.mxu0 0.0
  %1184 = vmatpush2.msra.mxu0 0.0
  %1185 = vmatprep.subr.mxu0 0.0
  %1186 = vmatpush2.msra.mxu0 0.0
  %1187 = vmatprep.subr.mxu0 0.0
  %1188 = vmatpush2.msra.mxu0 0.0
  %1189 = vmatprep.subr.mxu0 0.0
  %1190 = vmatpush2.msra.mxu0 0.0
  %1191 = vmatprep.subr.mxu0 0.0
  %1192 = vmatpush2.msra.mxu0 0.0
  %1193 = vmatprep.subr.mxu0 0.0
  %1194 = vmatpush2.msra.mxu0 0.0
  %1195 = vmatprep.mubr.f32.mxu0 0.0
  %1196 = vmatmul.mubr.f32.gmra.mxu0 %v1035
  %v1197 = vpop.f32.mrf.mxu0
  %v1198 = vadd.f32 0.0, %v1197
  %v1199 = vpop.f32.mrf.mxu0
  %1200 = vdwg.mxu0
  %v1201 = vadd.f32 %v1130, %v1198
  %1203 = vrot.lane.b32.xlu0 %v1128, 64
  %v1204 = vpop.permute.xlu0 %1203
  %v1205 = vsel %vm56, %v1204, 0
  %1207 = vmatprep.subr.mxu0 0.0
  %1208 = vmatpush1.msra.mxu0 0.0
  %1209 = vmatprep.subr.mxu0 0.0
  %1210 = vmatpush1.msra.mxu0 0.0
  %1211 = vmatprep.subr.mxu0 0.0
  %1212 = vmatpush1.msra.mxu0 0.0
  %1213 = vmatprep.subr.mxu0 0.0
  %1214 = vmatpush1.msra.mxu0 0.0
  %1215 = vmatprep.subr.mxu0 0.0
  %1216 = vmatpush1.msra.mxu0 0.0
  %1217 = vmatprep.subr.mxu0 0.0
  %1218 = vmatpush1.msra.mxu0 0.0
  %1219 = vmatprep.subr.mxu0 0.0
  %1220 = vmatpush1.msra.mxu0 0.0
  %1221 = vmatprep.subr.mxu0 0.0
  %1222 = vmatpush1.msra.mxu0 0.0
  %1223 = vmatprep.subr.mxu0 0.0
  %1224 = vmatpush1.msra.mxu0 0.0
  %1225 = vmatprep.subr.mxu0 0.0
  %1226 = vmatpush1.msra.mxu0 0.0
  %1227 = vmatprep.subr.mxu0 0.0
  %1228 = vmatpush1.msra.mxu0 0.0
  %1229 = vmatprep.subr.mxu0 0.0
  %1230 = vmatpush1.msra.mxu0 0.0
  %1231 = vmatprep.subr.mxu0 0.0
  %1232 = vmatpush1.msra.mxu0 %v46
  %1233 = vmatprep.subr.mxu0 0.0
  %1234 = vmatpush1.msra.mxu0 %v45
  %1235 = vmatprep.subr.mxu0 0.0
  %1236 = vmatpush1.msra.mxu0 %v44
  %1237 = vmatprep.subr.mxu0 0.0
  %1238 = vmatpush1.msra.mxu0 %v43
  %1239 = vmatprep.subr.mxu0 0.0
  %1240 = vmatpush2.msra.mxu0 0.0
  %1241 = vmatprep.subr.mxu0 0.0
  %1242 = vmatpush2.msra.mxu0 0.0
  %1243 = vmatprep.subr.mxu0 0.0
  %1244 = vmatpush2.msra.mxu0 0.0
  %1245 = vmatprep.subr.mxu0 0.0
  %1246 = vmatpush2.msra.mxu0 0.0
  %1247 = vmatprep.subr.mxu0 0.0
  %1248 = vmatpush2.msra.mxu0 0.0
  %1249 = vmatprep.subr.mxu0 0.0
  %1250 = vmatpush2.msra.mxu0 0.0
  %1251 = vmatprep.subr.mxu0 0.0
  %1252 = vmatpush2.msra.mxu0 0.0
  %1253 = vmatprep.subr.mxu0 0.0
  %1254 = vmatpush2.msra.mxu0 0.0
  %1255 = vmatprep.subr.mxu0 0.0
  %1256 = vmatpush2.msra.mxu0 0.0
  %1257 = vmatprep.subr.mxu0 0.0
  %1258 = vmatpush2.msra.mxu0 0.0
  %1259 = vmatprep.subr.mxu0 0.0
  %1260 = vmatpush2.msra.mxu0 0.0
  %1261 = vmatprep.subr.mxu0 0.0
  %1262 = vmatpush2.msra.mxu0 0.0
  %1263 = vmatprep.subr.mxu0 0.0
  %1264 = vmatpush2.msra.mxu0 0.0
  %1265 = vmatprep.subr.mxu0 0.0
  %1266 = vmatpush2.msra.mxu0 0.0
  %1267 = vmatprep.subr.mxu0 0.0
  %1268 = vmatpush2.msra.mxu0 0.0
  %1269 = vmatprep.subr.mxu0 0.0
  %1270 = vmatpush2.msra.mxu0 0.0
  %1271 = vmatprep.mubr.f32.mxu0 0.0
  %1272 = vmatmul.mubr.f32.gmra.mxu0 %v1205
  %v1273 = vpop.f32.mrf.mxu0
  %v1274 = vadd.f32 %v52, %v1273
  %v1275 = vpop.f32.mrf.mxu0
  %1276 = vdwg.mxu0
  %v1277 = vmul.f32 %v1201, 0.5
  %v1278 = vtanh.pop %v1277
  %v1279 = vmul.f32 %v1278, 0.5
  %v1280 = vadd.f32 %v1279, 0.5
  %v1281 = vtanh.pop %v1201
  %v1282 = vmul.f32 %v1280, %v1025
  %1284 = vrot.lane.b32.xlu0 %v1281, 32
  %v1285 = vpop.permute.xlu0 %1284
  %v1287 = vmul.f32 %v1280, %v1285
  %1289 = vrot.lane.b32.xlu0 %v1287, 32
  %v1290 = vpop.permute.xlu0 %1289
  %v1292 = vadd.f32 %v1282, %v1290
  %v1293 = vtanh.pop %v1292
  %1295 = vrot.lane.b32.xlu0 %v1293, 32
  %v1296 = vpop.permute.xlu0 %1295
  %v1298 = vmul.f32 %v1280, %v1296
  %1300 = vrot.lane.b32.xlu0 %v1298, 64
  %v1301 = vpop.permute.xlu0 %1300
  %v1302 = vsel %vm56, %v1301, 0
  %1304 = vmatprep.subr.mxu0 0.0
  %1305 = vmatpush1.msra.mxu0 0.0
  %1306 = vmatprep.subr.mxu0 0.0
  %1307 = vmatpush1.msra.mxu0 0.0
  %1308 = vmatprep.subr.mxu0 0.0
  %1309 = vmatpush1.msra.mxu0 0.0
  %1310 = vmatprep.subr.mxu0 0.0
  %1311 = vmatpush1.msra.mxu0 0.0
  %1312 = vmatprep.subr.mxu0 0.0
  %1313 = vmatpush1.msra.mxu0 0.0
  %1314 = vmatprep.subr.mxu0 0.0
  %1315 = vmatpush1.msra.mxu0 0.0
  %1316 = vmatprep.subr.mxu0 0.0
  %1317 = vmatpush1.msra.mxu0 0.0
  %1318 = vmatprep.subr.mxu0 0.0
  %1319 = vmatpush1.msra.mxu0 0.0
  %1320 = vmatprep.subr.mxu0 0.0
  %1321 = vmatpush1.msra.mxu0 0.0
  %1322 = vmatprep.subr.mxu0 0.0
  %1323 = vmatpush1.msra.mxu0 0.0
  %1324 = vmatprep.subr.mxu0 0.0
  %1325 = vmatpush1.msra.mxu0 0.0
  %1326 = vmatprep.subr.mxu0 0.0
  %1327 = vmatpush1.msra.mxu0 0.0
  %1328 = vmatprep.subr.mxu0 0.0
  %1329 = vmatpush1.msra.mxu0 %v42
  %1330 = vmatprep.subr.mxu0 0.0
  %1331 = vmatpush1.msra.mxu0 %v41
  %1332 = vmatprep.subr.mxu0 0.0
  %1333 = vmatpush1.msra.mxu0 %v40
  %1334 = vmatprep.subr.mxu0 0.0
  %1335 = vmatpush1.msra.mxu0 %v39
  %1336 = vmatprep.subr.mxu0 0.0
  %1337 = vmatpush2.msra.mxu0 0.0
  %1338 = vmatprep.subr.mxu0 0.0
  %1339 = vmatpush2.msra.mxu0 0.0
  %1340 = vmatprep.subr.mxu0 0.0
  %1341 = vmatpush2.msra.mxu0 0.0
  %1342 = vmatprep.subr.mxu0 0.0
  %1343 = vmatpush2.msra.mxu0 0.0
  %1344 = vmatprep.subr.mxu0 0.0
  %1345 = vmatpush2.msra.mxu0 0.0
  %1346 = vmatprep.subr.mxu0 0.0
  %1347 = vmatpush2.msra.mxu0 0.0
  %1348 = vmatprep.subr.mxu0 0.0
  %1349 = vmatpush2.msra.mxu0 0.0
  %1350 = vmatprep.subr.mxu0 0.0
  %1351 = vmatpush2.msra.mxu0 0.0
  %1352 = vmatprep.subr.mxu0 0.0
  %1353 = vmatpush2.msra.mxu0 0.0
  %1354 = vmatprep.subr.mxu0 0.0
  %1355 = vmatpush2.msra.mxu0 0.0
  %1356 = vmatprep.subr.mxu0 0.0
  %1357 = vmatpush2.msra.mxu0 0.0
  %1358 = vmatprep.subr.mxu0 0.0
  %1359 = vmatpush2.msra.mxu0 0.0
  %1360 = vmatprep.subr.mxu0 0.0
  %1361 = vmatpush2.msra.mxu0 0.0
  %1362 = vmatprep.subr.mxu0 0.0
  %1363 = vmatpush2.msra.mxu0 0.0
  %1364 = vmatprep.subr.mxu0 0.0
  %1365 = vmatpush2.msra.mxu0 0.0
  %1366 = vmatprep.subr.mxu0 0.0
  %1367 = vmatpush2.msra.mxu0 0.0
  %1368 = vmatprep.mubr.f32.mxu0 0.0
  %1369 = vmatmul.mubr.f32.gmra.mxu0 %v1302
  %v1370 = vpop.f32.mrf.mxu0
  %v1371 = vadd.f32 %v1274, %v1370
  %v1372 = vpop.f32.mrf.mxu0
  %1373 = vdwg.mxu0
  %v1374 = vmul.f32 %v1371, 0.5
  %v1375 = vtanh.pop %v1374
  %v1376 = vmul.f32 %v1375, 0.5
  %v1377 = vadd.f32 %v1376, 0.5
  %v1378 = vtanh.pop %v1371
  %v1379 = vmul.f32 %v1377, %v1122
  %1381 = vrot.lane.b32.xlu0 %v1378, 32
  %v1382 = vpop.permute.xlu0 %1381
  %v1384 = vmul.f32 %v1377, %v1382
  %1386 = vrot.lane.b32.xlu0 %v1384, 32
  %v1387 = vpop.permute.xlu0 %1386
  %v1389 = vadd.f32 %v1379, %v1387
  %v1390 = vtanh.pop %v1389
  %1392 = vrot.lane.b32.xlu0 %v1390, 32
  %v1393 = vpop.permute.xlu0 %1392
  %v1395 = vmul.f32 %v1377, %v1393
  %s1396 = scalar_lea.vmem %s0, 40
  %v1397 = vld [vmem:[%s1396] sm:$0xff]
  %1398 = vmatprep.subr.mxu0 0.0
  %1399 = vmatpush1.msra.mxu0 0.0
  %1400 = vmatprep.subr.mxu0 0.0
  %1401 = vmatpush1.msra.mxu0 0.0
  %1402 = vmatprep.subr.mxu0 0.0
  %1403 = vmatpush1.msra.mxu0 0.0
  %1404 = vmatprep.subr.mxu0 0.0
  %1405 = vmatpush1.msra.mxu0 0.0
  %1406 = vmatprep.subr.mxu0 0.0
  %1407 = vmatpush1.msra.mxu0 0.0
  %1408 = vmatprep.subr.mxu0 0.0
  %1409 = vmatpush1.msra.mxu0 0.0
  %1410 = vmatprep.subr.mxu0 0.0
  %1411 = vmatpush1.msra.mxu0 0.0
  %1412 = vmatprep.subr.mxu0 0.0
  %1413 = vmatpush1.msra.mxu0 0.0
  %1414 = vmatprep.subr.mxu0 0.0
  %1415 = vmatpush1.msra.mxu0 0.0
  %1416 = vmatprep.subr.mxu0 0.0
  %1417 = vmatpush1.msra.mxu0 0.0
  %1418 = vmatprep.subr.mxu0 0.0
  %1419 = vmatpush1.msra.mxu0 0.0
  %1420 = vmatprep.subr.mxu0 0.0
  %1421 = vmatpush1.msra.mxu0 0.0
  %1422 = vmatprep.subr.mxu0 0.0
  %1423 = vmatpush1.msra.mxu0 %v38
  %1424 = vmatprep.subr.mxu0 0.0
  %1425 = vmatpush1.msra.mxu0 %v37
  %1426 = vmatprep.subr.mxu0 0.0
  %1427 = vmatpush1.msra.mxu0 %v36
  %1428 = vmatprep.subr.mxu0 0.0
  %1429 = vmatpush1.msra.mxu0 %v35
  %1430 = vmatprep.subr.mxu0 0.0
  %1431 = vmatpush2.msra.mxu0 0.0
  %1432 = vmatprep.subr.mxu0 0.0
  %1433 = vmatpush2.msra.mxu0 0.0
  %1434 = vmatprep.subr.mxu0 0.0
  %1435 = vmatpush2.msra.mxu0 0.0
  %1436 = vmatprep.subr.mxu0 0.0
  %1437 = vmatpush2.msra.mxu0 0.0
  %1438 = vmatprep.subr.mxu0 0.0
  %1439 = vmatpush2.msra.mxu0 0.0
  %1440 = vmatprep.subr.mxu0 0.0
  %1441 = vmatpush2.msra.mxu0 0.0
  %1442 = vmatprep.subr.mxu0 0.0
  %1443 = vmatpush2.msra.mxu0 0.0
  %1444 = vmatprep.subr.mxu0 0.0
  %1445 = vmatpush2.msra.mxu0 0.0
  %1446 = vmatprep.subr.mxu0 0.0
  %1447 = vmatpush2.msra.mxu0 0.0
  %1448 = vmatprep.subr.mxu0 0.0
  %1449 = vmatpush2.msra.mxu0 0.0
  %1450 = vmatprep.subr.mxu0 0.0
  %1451 = vmatpush2.msra.mxu0 0.0
  %1452 = vmatprep.subr.mxu0 0.0
  %1453 = vmatpush2.msra.mxu0 0.0
  %1454 = vmatprep.subr.mxu0 0.0
  %1455 = vmatpush2.msra.mxu0 0.0
  %1456 = vmatprep.subr.mxu0 0.0
  %1457 = vmatpush2.msra.mxu0 0.0
  %1458 = vmatprep.subr.mxu0 0.0
  %1459 = vmatpush2.msra.mxu0 0.0
  %1460 = vmatprep.subr.mxu0 0.0
  %1461 = vmatpush2.msra.mxu0 0.0
  %1462 = vmatprep.mubr.f32.mxu0 0.0
  %1463 = vmatmul.mubr.f32.gmra.mxu0 %v1302
  %v1464 = vpop.f32.mrf.mxu0
  %v1465 = vadd.f32 0.0, %v1464
  %v1466 = vpop.f32.mrf.mxu0
  %1467 = vdwg.mxu0
  %v1468 = vadd.f32 %v1397, %v1465
  %1470 = vrot.lane.b32.xlu0 %v1395, 64
  %v1471 = vpop.permute.xlu0 %1470
  %v1472 = vsel %vm56, %v1471, 0
  %1474 = vmatprep.subr.mxu0 0.0
  %1475 = vmatpush1.msra.mxu0 0.0
  %1476 = vmatprep.subr.mxu0 0.0
  %1477 = vmatpush1.msra.mxu0 0.0
  %1478 = vmatprep.subr.mxu0 0.0
  %1479 = vmatpush1.msra.mxu0 0.0
  %1480 = vmatprep.subr.mxu0 0.0
  %1481 = vmatpush1.msra.mxu0 0.0
  %1482 = vmatprep.subr.mxu0 0.0
  %1483 = vmatpush1.msra.mxu0 0.0
  %1484 = vmatprep.subr.mxu0 0.0
  %1485 = vmatpush1.msra.mxu0 0.0
  %1486 = vmatprep.subr.mxu0 0.0
  %1487 = vmatpush1.msra.mxu0 0.0
  %1488 = vmatprep.subr.mxu0 0.0
  %1489 = vmatpush1.msra.mxu0 0.0
  %1490 = vmatprep.subr.mxu0 0.0
  %1491 = vmatpush1.msra.mxu0 0.0
  %1492 = vmatprep.subr.mxu0 0.0
  %1493 = vmatpush1.msra.mxu0 0.0
  %1494 = vmatprep.subr.mxu0 0.0
  %1495 = vmatpush1.msra.mxu0 0.0
  %1496 = vmatprep.subr.mxu0 0.0
  %1497 = vmatpush1.msra.mxu0 0.0
  %1498 = vmatprep.subr.mxu0 0.0
  %1499 = vmatpush1.msra.mxu0 %v46
  %1500 = vmatprep.subr.mxu0 0.0
  %1501 = vmatpush1.msra.mxu0 %v45
  %1502 = vmatprep.subr.mxu0 0.0
  %1503 = vmatpush1.msra.mxu0 %v44
  %1504 = vmatprep.subr.mxu0 0.0
  %1505 = vmatpush1.msra.mxu0 %v43
  %1506 = vmatprep.subr.mxu0 0.0
  %1507 = vmatpush2.msra.mxu0 0.0
  %1508 = vmatprep.subr.mxu0 0.0
  %1509 = vmatpush2.msra.mxu0 0.0
  %1510 = vmatprep.subr.mxu0 0.0
  %1511 = vmatpush2.msra.mxu0 0.0
  %1512 = vmatprep.subr.mxu0 0.0
  %1513 = vmatpush2.msra.mxu0 0.0
  %1514 = vmatprep.subr.mxu0 0.0
  %1515 = vmatpush2.msra.mxu0 0.0
  %1516 = vmatprep.subr.mxu0 0.0
  %1517 = vmatpush2.msra.mxu0 0.0
  %1518 = vmatprep.subr.mxu0 0.0
  %1519 = vmatpush2.msra.mxu0 0.0
  %1520 = vmatprep.subr.mxu0 0.0
  %1521 = vmatpush2.msra.mxu0 0.0
  %1522 = vmatprep.subr.mxu0 0.0
  %1523 = vmatpush2.msra.mxu0 0.0
  %1524 = vmatprep.subr.mxu0 0.0
  %1525 = vmatpush2.msra.mxu0 0.0
  %1526 = vmatprep.subr.mxu0 0.0
  %1527 = vmatpush2.msra.mxu0 0.0
  %1528 = vmatprep.subr.mxu0 0.0
  %1529 = vmatpush2.msra.mxu0 0.0
  %1530 = vmatprep.subr.mxu0 0.0
  %1531 = vmatpush2.msra.mxu0 0.0
  %1532 = vmatprep.subr.mxu0 0.0
  %1533 = vmatpush2.msra.mxu0 0.0
  %1534 = vmatprep.subr.mxu0 0.0
  %1535 = vmatpush2.msra.mxu0 0.0
  %1536 = vmatprep.subr.mxu0 0.0
  %1537 = vmatpush2.msra.mxu0 0.0
  %1538 = vmatprep.mubr.f32.mxu0 0.0
  %1539 = vmatmul.mubr.f32.gmra.mxu0 %v1472
  %v1540 = vpop.f32.mrf.mxu0
  %v1541 = vadd.f32 %v52, %v1540
  %v1542 = vpop.f32.mrf.mxu0
  %1543 = vdwg.mxu0
  %v1544 = vmul.f32 %v1468, 0.5
  %v1545 = vtanh.pop %v1544
  %v1546 = vmul.f32 %v1545, 0.5
  %v1547 = vadd.f32 %v1546, 0.5
  %v1548 = vtanh.pop %v1468
  %v1549 = vmul.f32 %v1547, %v1292
  %1551 = vrot.lane.b32.xlu0 %v1548, 32
  %v1552 = vpop.permute.xlu0 %1551
  %v1554 = vmul.f32 %v1547, %v1552
  %1556 = vrot.lane.b32.xlu0 %v1554, 32
  %v1557 = vpop.permute.xlu0 %1556
  %v1559 = vadd.f32 %v1549, %v1557
  %v1560 = vtanh.pop %v1559
  %1562 = vrot.lane.b32.xlu0 %v1560, 32
  %v1563 = vpop.permute.xlu0 %1562
  %v1565 = vmul.f32 %v1547, %v1563
  %1567 = vrot.lane.b32.xlu0 %v1565, 64
  %v1568 = vpop.permute.xlu0 %1567
  %v1569 = vsel %vm56, %v1568, 0
  %1571 = vmatprep.subr.mxu0 0.0
  %1572 = vmatpush1.msra.mxu0 0.0
  %1573 = vmatprep.subr.mxu0 0.0
  %1574 = vmatpush1.msra.mxu0 0.0
  %1575 = vmatprep.subr.mxu0 0.0
  %1576 = vmatpush1.msra.mxu0 0.0
  %1577 = vmatprep.subr.mxu0 0.0
  %1578 = vmatpush1.msra.mxu0 0.0
  %1579 = vmatprep.subr.mxu0 0.0
  %1580 = vmatpush1.msra.mxu0 0.0
  %1581 = vmatprep.subr.mxu0 0.0
  %1582 = vmatpush1.msra.mxu0 0.0
  %1583 = vmatprep.subr.mxu0 0.0
  %1584 = vmatpush1.msra.mxu0 0.0
  %1585 = vmatprep.subr.mxu0 0.0
  %1586 = vmatpush1.msra.mxu0 0.0
  %1587 = vmatprep.subr.mxu0 0.0
  %1588 = vmatpush1.msra.mxu0 0.0
  %1589 = vmatprep.subr.mxu0 0.0
  %1590 = vmatpush1.msra.mxu0 0.0
  %1591 = vmatprep.subr.mxu0 0.0
  %1592 = vmatpush1.msra.mxu0 0.0
  %1593 = vmatprep.subr.mxu0 0.0
  %1594 = vmatpush1.msra.mxu0 0.0
  %1595 = vmatprep.subr.mxu0 0.0
  %1596 = vmatpush1.msra.mxu0 %v42
  %1597 = vmatprep.subr.mxu0 0.0
  %1598 = vmatpush1.msra.mxu0 %v41
  %1599 = vmatprep.subr.mxu0 0.0
  %1600 = vmatpush1.msra.mxu0 %v40
  %1601 = vmatprep.subr.mxu0 0.0
  %1602 = vmatpush1.msra.mxu0 %v39
  %1603 = vmatprep.subr.mxu0 0.0
  %1604 = vmatpush2.msra.mxu0 0.0
  %1605 = vmatprep.subr.mxu0 0.0
  %1606 = vmatpush2.msra.mxu0 0.0
  %1607 = vmatprep.subr.mxu0 0.0
  %1608 = vmatpush2.msra.mxu0 0.0
  %1609 = vmatprep.subr.mxu0 0.0
  %1610 = vmatpush2.msra.mxu0 0.0
  %1611 = vmatprep.subr.mxu0 0.0
  %1612 = vmatpush2.msra.mxu0 0.0
  %1613 = vmatprep.subr.mxu0 0.0
  %1614 = vmatpush2.msra.mxu0 0.0
  %1615 = vmatprep.subr.mxu0 0.0
  %1616 = vmatpush2.msra.mxu0 0.0
  %1617 = vmatprep.subr.mxu0 0.0
  %1618 = vmatpush2.msra.mxu0 0.0
  %1619 = vmatprep.subr.mxu0 0.0
  %1620 = vmatpush2.msra.mxu0 0.0
  %1621 = vmatprep.subr.mxu0 0.0
  %1622 = vmatpush2.msra.mxu0 0.0
  %1623 = vmatprep.subr.mxu0 0.0
  %1624 = vmatpush2.msra.mxu0 0.0
  %1625 = vmatprep.subr.mxu0 0.0
  %1626 = vmatpush2.msra.mxu0 0.0
  %1627 = vmatprep.subr.mxu0 0.0
  %1628 = vmatpush2.msra.mxu0 0.0
  %1629 = vmatprep.subr.mxu0 0.0
  %1630 = vmatpush2.msra.mxu0 0.0
  %1631 = vmatprep.subr.mxu0 0.0
  %1632 = vmatpush2.msra.mxu0 0.0
  %1633 = vmatprep.subr.mxu0 0.0
  %1634 = vmatpush2.msra.mxu0 0.0
  %1635 = vmatprep.mubr.f32.mxu0 0.0
  %1636 = vmatmul.mubr.f32.gmra.mxu0 %v1569
  %v1637 = vpop.f32.mrf.mxu0
  %v1638 = vadd.f32 %v1541, %v1637
  %v1639 = vpop.f32.mrf.mxu0
  %1640 = vdwg.mxu0
  %v1641 = vmul.f32 %v1638, 0.5
  %v1642 = vtanh.pop %v1641
  %v1643 = vmul.f32 %v1642, 0.5
  %v1644 = vadd.f32 %v1643, 0.5
  %v1645 = vtanh.pop %v1638
  %v1646 = vmul.f32 %v1644, %v1389
  %1648 = vrot.lane.b32.xlu0 %v1645, 32
  %v1649 = vpop.permute.xlu0 %1648
  %v1651 = vmul.f32 %v1644, %v1649
  %1653 = vrot.lane.b32.xlu0 %v1651, 32
  %v1654 = vpop.permute.xlu0 %1653
  %v1656 = vadd.f32 %v1646, %v1654
  %v1657 = vtanh.pop %v1656
  %1659 = vrot.lane.b32.xlu0 %v1657, 32
  %v1660 = vpop.permute.xlu0 %1659
  %v1662 = vmul.f32 %v1644, %v1660
  %s1663 = scalar_lea.vmem %s0, 48
  %v1664 = vld [vmem:[%s1663] sm:$0xff]
  %1665 = vmatprep.subr.mxu0 0.0
  %1666 = vmatpush1.msra.mxu0 0.0
  %1667 = vmatprep.subr.mxu0 0.0
  %1668 = vmatpush1.msra.mxu0 0.0
  %1669 = vmatprep.subr.mxu0 0.0
  %1670 = vmatpush1.msra.mxu0 0.0
  %1671 = vmatprep.subr.mxu0 0.0
  %1672 = vmatpush1.msra.mxu0 0.0
  %1673 = vmatprep.subr.mxu0 0.0
  %1674 = vmatpush1.msra.mxu0 0.0
  %1675 = vmatprep.subr.mxu0 0.0
  %1676 = vmatpush1.msra.mxu0 0.0
  %1677 = vmatprep.subr.mxu0 0.0
  %1678 = vmatpush1.msra.mxu0 0.0
  %1679 = vmatprep.subr.mxu0 0.0
  %1680 = vmatpush1.msra.mxu0 0.0
  %1681 = vmatprep.subr.mxu0 0.0
  %1682 = vmatpush1.msra.mxu0 0.0
  %1683 = vmatprep.subr.mxu0 0.0
  %1684 = vmatpush1.msra.mxu0 0.0
  %1685 = vmatprep.subr.mxu0 0.0
  %1686 = vmatpush1.msra.mxu0 0.0
  %1687 = vmatprep.subr.mxu0 0.0
  %1688 = vmatpush1.msra.mxu0 0.0
  %1689 = vmatprep.subr.mxu0 0.0
  %1690 = vmatpush1.msra.mxu0 %v38
  %1691 = vmatprep.subr.mxu0 0.0
  %1692 = vmatpush1.msra.mxu0 %v37
  %1693 = vmatprep.subr.mxu0 0.0
  %1694 = vmatpush1.msra.mxu0 %v36
  %1695 = vmatprep.subr.mxu0 0.0
  %1696 = vmatpush1.msra.mxu0 %v35
  %1697 = vmatprep.subr.mxu0 0.0
  %1698 = vmatpush2.msra.mxu0 0.0
  %1699 = vmatprep.subr.mxu0 0.0
  %1700 = vmatpush2.msra.mxu0 0.0
  %1701 = vmatprep.subr.mxu0 0.0
  %1702 = vmatpush2.msra.mxu0 0.0
  %1703 = vmatprep.subr.mxu0 0.0
  %1704 = vmatpush2.msra.mxu0 0.0
  %1705 = vmatprep.subr.mxu0 0.0
  %1706 = vmatpush2.msra.mxu0 0.0
  %1707 = vmatprep.subr.mxu0 0.0
  %1708 = vmatpush2.msra.mxu0 0.0
  %1709 = vmatprep.subr.mxu0 0.0
  %1710 = vmatpush2.msra.mxu0 0.0
  %1711 = vmatprep.subr.mxu0 0.0
  %1712 = vmatpush2.msra.mxu0 0.0
  %1713 = vmatprep.subr.mxu0 0.0
  %1714 = vmatpush2.msra.mxu0 0.0
  %1715 = vmatprep.subr.mxu0 0.0
  %1716 = vmatpush2.msra.mxu0 0.0
  %1717 = vmatprep.subr.mxu0 0.0
  %1718 = vmatpush2.msra.mxu0 0.0
  %1719 = vmatprep.subr.mxu0 0.0
  %1720 = vmatpush2.msra.mxu0 0.0
  %1721 = vmatprep.subr.mxu0 0.0
  %1722 = vmatpush2.msra.mxu0 0.0
  %1723 = vmatprep.subr.mxu0 0.0
  %1724 = vmatpush2.msra.mxu0 0.0
  %1725 = vmatprep.subr.mxu0 0.0
  %1726 = vmatpush2.msra.mxu0 0.0
  %1727 = vmatprep.subr.mxu0 0.0
  %1728 = vmatpush2.msra.mxu0 0.0
  %1729 = vmatprep.mubr.f32.mxu0 0.0
  %1730 = vmatmul.mubr.f32.gmra.mxu0 %v1569
  %v1731 = vpop.f32.mrf.mxu0
  %v1732 = vadd.f32 0.0, %v1731
  %v1733 = vpop.f32.mrf.mxu0
  %1734 = vdwg.mxu0
  %v1735 = vadd.f32 %v1664, %v1732
  %1737 = vrot.lane.b32.xlu0 %v1662, 64
  %v1738 = vpop.permute.xlu0 %1737
  %v1739 = vsel %vm56, %v1738, 0
  %1741 = vmatprep.subr.mxu0 0.0
  %1742 = vmatpush1.msra.mxu0 0.0
  %1743 = vmatprep.subr.mxu0 0.0
  %1744 = vmatpush1.msra.mxu0 0.0
  %1745 = vmatprep.subr.mxu0 0.0
  %1746 = vmatpush1.msra.mxu0 0.0
  %1747 = vmatprep.subr.mxu0 0.0
  %1748 = vmatpush1.msra.mxu0 0.0
  %1749 = vmatprep.subr.mxu0 0.0
  %1750 = vmatpush1.msra.mxu0 0.0
  %1751 = vmatprep.subr.mxu0 0.0
  %1752 = vmatpush1.msra.mxu0 0.0
  %1753 = vmatprep.subr.mxu0 0.0
  %1754 = vmatpush1.msra.mxu0 0.0
  %1755 = vmatprep.subr.mxu0 0.0
  %1756 = vmatpush1.msra.mxu0 0.0
  %1757 = vmatprep.subr.mxu0 0.0
  %1758 = vmatpush1.msra.mxu0 0.0
  %1759 = vmatprep.subr.mxu0 0.0
  %1760 = vmatpush1.msra.mxu0 0.0
  %1761 = vmatprep.subr.mxu0 0.0
  %1762 = vmatpush1.msra.mxu0 0.0
  %1763 = vmatprep.subr.mxu0 0.0
  %1764 = vmatpush1.msra.mxu0 0.0
  %1765 = vmatprep.subr.mxu0 0.0
  %1766 = vmatpush1.msra.mxu0 %v46
  %1767 = vmatprep.subr.mxu0 0.0
  %1768 = vmatpush1.msra.mxu0 %v45
  %1769 = vmatprep.subr.mxu0 0.0
  %1770 = vmatpush1.msra.mxu0 %v44
  %1771 = vmatprep.subr.mxu0 0.0
  %1772 = vmatpush1.msra.mxu0 %v43
  %1773 = vmatprep.subr.mxu0 0.0
  %1774 = vmatpush2.msra.mxu0 0.0
  %1775 = vmatprep.subr.mxu0 0.0
  %1776 = vmatpush2.msra.mxu0 0.0
  %1777 = vmatprep.subr.mxu0 0.0
  %1778 = vmatpush2.msra.mxu0 0.0
  %1779 = vmatprep.subr.mxu0 0.0
  %1780 = vmatpush2.msra.mxu0 0.0
  %1781 = vmatprep.subr.mxu0 0.0
  %1782 = vmatpush2.msra.mxu0 0.0
  %1783 = vmatprep.subr.mxu0 0.0
  %1784 = vmatpush2.msra.mxu0 0.0
  %1785 = vmatprep.subr.mxu0 0.0
  %1786 = vmatpush2.msra.mxu0 0.0
  %1787 = vmatprep.subr.mxu0 0.0
  %1788 = vmatpush2.msra.mxu0 0.0
  %1789 = vmatprep.subr.mxu0 0.0
  %1790 = vmatpush2.msra.mxu0 0.0
  %1791 = vmatprep.subr.mxu0 0.0
  %1792 = vmatpush2.msra.mxu0 0.0
  %1793 = vmatprep.subr.mxu0 0.0
  %1794 = vmatpush2.msra.mxu0 0.0
  %1795 = vmatprep.subr.mxu0 0.0
  %1796 = vmatpush2.msra.mxu0 0.0
  %1797 = vmatprep.subr.mxu0 0.0
  %1798 = vmatpush2.msra.mxu0 0.0
  %1799 = vmatprep.subr.mxu0 0.0
  %1800 = vmatpush2.msra.mxu0 0.0
  %1801 = vmatprep.subr.mxu0 0.0
  %1802 = vmatpush2.msra.mxu0 0.0
  %1803 = vmatprep.subr.mxu0 0.0
  %1804 = vmatpush2.msra.mxu0 0.0
  %1805 = vmatprep.mubr.f32.mxu0 0.0
  %1806 = vmatmul.mubr.f32.gmra.mxu0 %v1739
  %v1807 = vpop.f32.mrf.mxu0
  %v1808 = vadd.f32 %v52, %v1807
  %v1809 = vpop.f32.mrf.mxu0
  %1810 = vdwg.mxu0
  %v1811 = vmul.f32 %v1735, 0.5
  %v1812 = vtanh.pop %v1811
  %v1813 = vmul.f32 %v1812, 0.5
  %v1814 = vadd.f32 %v1813, 0.5
  %v1815 = vtanh.pop %v1735
  %v1816 = vmul.f32 %v1814, %v1559
  %1818 = vrot.lane.b32.xlu0 %v1815, 32
  %v1819 = vpop.permute.xlu0 %1818
  %v1821 = vmul.f32 %v1814, %v1819
  %1823 = vrot.lane.b32.xlu0 %v1821, 32
  %v1824 = vpop.permute.xlu0 %1823
  %v1826 = vadd.f32 %v1816, %v1824
  %v1827 = vtanh.pop %v1826
  %1829 = vrot.lane.b32.xlu0 %v1827, 32
  %v1830 = vpop.permute.xlu0 %1829
  %v1832 = vmul.f32 %v1814, %v1830
  %1834 = vrot.lane.b32.xlu0 %v1832, 64
  %v1835 = vpop.permute.xlu0 %1834
  %v1836 = vsel %vm56, %v1835, 0
  %1838 = vmatprep.subr.mxu0 0.0
  %1839 = vmatpush1.msra.mxu0 0.0
  %1840 = vmatprep.subr.mxu0 0.0
  %1841 = vmatpush1.msra.mxu0 0.0
  %1842 = vmatprep.subr.mxu0 0.0
  %1843 = vmatpush1.msra.mxu0 0.0
  %1844 = vmatprep.subr.mxu0 0.0
  %1845 = vmatpush1.msra.mxu0 0.0
  %1846 = vmatprep.subr.mxu0 0.0
  %1847 = vmatpush1.msra.mxu0 0.0
  %1848 = vmatprep.subr.mxu0 0.0
  %1849 = vmatpush1.msra.mxu0 0.0
  %1850 = vmatprep.subr.mxu0 0.0
  %1851 = vmatpush1.msra.mxu0 0.0
  %1852 = vmatprep.subr.mxu0 0.0
  %1853 = vmatpush1.msra.mxu0 0.0
  %1854 = vmatprep.subr.mxu0 0.0
  %1855 = vmatpush1.msra.mxu0 0.0
  %1856 = vmatprep.subr.mxu0 0.0
  %1857 = vmatpush1.msra.mxu0 0.0
  %1858 = vmatprep.subr.mxu0 0.0
  %1859 = vmatpush1.msra.mxu0 0.0
  %1860 = vmatprep.subr.mxu0 0.0
  %1861 = vmatpush1.msra.mxu0 0.0
  %1862 = vmatprep.subr.mxu0 0.0
  %1863 = vmatpush1.msra.mxu0 %v42
  %1864 = vmatprep.subr.mxu0 0.0
  %1865 = vmatpush1.msra.mxu0 %v41
  %1866 = vmatprep.subr.mxu0 0.0
  %1867 = vmatpush1.msra.mxu0 %v40
  %1868 = vmatprep.subr.mxu0 0.0
  %1869 = vmatpush1.msra.mxu0 %v39
  %1870 = vmatprep.subr.mxu0 0.0
  %1871 = vmatpush2.msra.mxu0 0.0
  %1872 = vmatprep.subr.mxu0 0.0
  %1873 = vmatpush2.msra.mxu0 0.0
  %1874 = vmatprep.subr.mxu0 0.0
  %1875 = vmatpush2.msra.mxu0 0.0
  %1876 = vmatprep.subr.mxu0 0.0
  %1877 = vmatpush2.msra.mxu0 0.0
  %1878 = vmatprep.subr.mxu0 0.0
  %1879 = vmatpush2.msra.mxu0 0.0
  %1880 = vmatprep.subr.mxu0 0.0
  %1881 = vmatpush2.msra.mxu0 0.0
  %1882 = vmatprep.subr.mxu0 0.0
  %1883 = vmatpush2.msra.mxu0 0.0
  %1884 = vmatprep.subr.mxu0 0.0
  %1885 = vmatpush2.msra.mxu0 0.0
  %1886 = vmatprep.subr.mxu0 0.0
  %1887 = vmatpush2.msra.mxu0 0.0
  %1888 = vmatprep.subr.mxu0 0.0
  %1889 = vmatpush2.msra.mxu0 0.0
  %1890 = vmatprep.subr.mxu0 0.0
  %1891 = vmatpush2.msra.mxu0 0.0
  %1892 = vmatprep.subr.mxu0 0.0
  %1893 = vmatpush2.msra.mxu0 0.0
  %1894 = vmatprep.subr.mxu0 0.0
  %1895 = vmatpush2.msra.mxu0 0.0
  %1896 = vmatprep.subr.mxu0 0.0
  %1897 = vmatpush2.msra.mxu0 0.0
  %1898 = vmatprep.subr.mxu0 0.0
  %1899 = vmatpush2.msra.mxu0 0.0
  %1900 = vmatprep.subr.mxu0 0.0
  %1901 = vmatpush2.msra.mxu0 0.0
  %1902 = vmatprep.mubr.f32.mxu0 0.0
  %1903 = vmatmul.mubr.f32.gmra.mxu0 %v1836
  %v1904 = vpop.f32.mrf.mxu0
  %v1905 = vadd.f32 %v1808, %v1904
  %v1906 = vpop.f32.mrf.mxu0
  %1907 = vdwg.mxu0
  %v1908 = vmul.f32 %v1905, 0.5
  %v1909 = vtanh.pop %v1908
  %v1910 = vmul.f32 %v1909, 0.5
  %v1911 = vadd.f32 %v1910, 0.5
  %v1912 = vtanh.pop %v1905
  %v1913 = vmul.f32 %v1911, %v1656
  %1915 = vrot.lane.b32.xlu0 %v1912, 32
  %v1916 = vpop.permute.xlu0 %1915
  %v1918 = vmul.f32 %v1911, %v1916
  %1920 = vrot.lane.b32.xlu0 %v1918, 32
  %v1921 = vpop.permute.xlu0 %1920
  %v1923 = vadd.f32 %v1913, %v1921
  %v1924 = vtanh.pop %v1923
  %1926 = vrot.lane.b32.xlu0 %v1924, 32
  %v1927 = vpop.permute.xlu0 %1926
  %v1929 = vmul.f32 %v1911, %v1927
  %s1930 = scalar_lea.vmem %s0, 56
  %v1931 = vld [vmem:[%s1930] sm:$0xff]
  %1932 = vmatprep.subr.mxu0 0.0
  %1933 = vmatpush1.msra.mxu0 0.0
  %1934 = vmatprep.subr.mxu0 0.0
  %1935 = vmatpush1.msra.mxu0 0.0
  %1936 = vmatprep.subr.mxu0 0.0
  %1937 = vmatpush1.msra.mxu0 0.0
  %1938 = vmatprep.subr.mxu0 0.0
  %1939 = vmatpush1.msra.mxu0 0.0
  %1940 = vmatprep.subr.mxu0 0.0
  %1941 = vmatpush1.msra.mxu0 0.0
  %1942 = vmatprep.subr.mxu0 0.0
  %1943 = vmatpush1.msra.mxu0 0.0
  %1944 = vmatprep.subr.mxu0 0.0
  %1945 = vmatpush1.msra.mxu0 0.0
  %1946 = vmatprep.subr.mxu0 0.0
  %1947 = vmatpush1.msra.mxu0 0.0
  %1948 = vmatprep.subr.mxu0 0.0
  %1949 = vmatpush1.msra.mxu0 0.0
  %1950 = vmatprep.subr.mxu0 0.0
  %1951 = vmatpush1.msra.mxu0 0.0
  %1952 = vmatprep.subr.mxu0 0.0
  %1953 = vmatpush1.msra.mxu0 0.0
  %1954 = vmatprep.subr.mxu0 0.0
  %1955 = vmatpush1.msra.mxu0 0.0
  %1956 = vmatprep.subr.mxu0 0.0
  %1957 = vmatpush1.msra.mxu0 %v38
  %1958 = vmatprep.subr.mxu0 0.0
  %1959 = vmatpush1.msra.mxu0 %v37
  %1960 = vmatprep.subr.mxu0 0.0
  %1961 = vmatpush1.msra.mxu0 %v36
  %1962 = vmatprep.subr.mxu0 0.0
  %1963 = vmatpush1.msra.mxu0 %v35
  %1964 = vmatprep.subr.mxu0 0.0
  %1965 = vmatpush2.msra.mxu0 0.0
  %1966 = vmatprep.subr.mxu0 0.0
  %1967 = vmatpush2.msra.mxu0 0.0
  %1968 = vmatprep.subr.mxu0 0.0
  %1969 = vmatpush2.msra.mxu0 0.0
  %1970 = vmatprep.subr.mxu0 0.0
  %1971 = vmatpush2.msra.mxu0 0.0
  %1972 = vmatprep.subr.mxu0 0.0
  %1973 = vmatpush2.msra.mxu0 0.0
  %1974 = vmatprep.subr.mxu0 0.0
  %1975 = vmatpush2.msra.mxu0 0.0
  %1976 = vmatprep.subr.mxu0 0.0
  %1977 = vmatpush2.msra.mxu0 0.0
  %1978 = vmatprep.subr.mxu0 0.0
  %1979 = vmatpush2.msra.mxu0 0.0
  %1980 = vmatprep.subr.mxu0 0.0
  %1981 = vmatpush2.msra.mxu0 0.0
  %1982 = vmatprep.subr.mxu0 0.0
  %1983 = vmatpush2.msra.mxu0 0.0
  %1984 = vmatprep.subr.mxu0 0.0
  %1985 = vmatpush2.msra.mxu0 0.0
  %1986 = vmatprep.subr.mxu0 0.0
  %1987 = vmatpush2.msra.mxu0 0.0
  %1988 = vmatprep.subr.mxu0 0.0
  %1989 = vmatpush2.msra.mxu0 0.0
  %1990 = vmatprep.subr.mxu0 0.0
  %1991 = vmatpush2.msra.mxu0 0.0
  %1992 = vmatprep.subr.mxu0 0.0
  %1993 = vmatpush2.msra.mxu0 0.0
  %1994 = vmatprep.subr.mxu0 0.0
  %1995 = vmatpush2.msra.mxu0 0.0
  %1996 = vmatprep.mubr.f32.mxu0 0.0
  %1997 = vmatmul.mubr.f32.gmra.mxu0 %v1836
  %v1998 = vpop.f32.mrf.mxu0
  %v1999 = vadd.f32 0.0, %v1998
  %v2000 = vpop.f32.mrf.mxu0
  %2001 = vdwg.mxu0
  %v2002 = vadd.f32 %v1931, %v1999
  %2004 = vrot.lane.b32.xlu0 %v1929, 64
  %v2005 = vpop.permute.xlu0 %2004
  %v2006 = vsel %vm56, %v2005, 0
  %2008 = vmatprep.subr.mxu0 0.0
  %2009 = vmatpush1.msra.mxu0 0.0
  %2010 = vmatprep.subr.mxu0 0.0
  %2011 = vmatpush1.msra.mxu0 0.0
  %2012 = vmatprep.subr.mxu0 0.0
  %2013 = vmatpush1.msra.mxu0 0.0
  %2014 = vmatprep.subr.mxu0 0.0
  %2015 = vmatpush1.msra.mxu0 0.0
  %2016 = vmatprep.subr.mxu0 0.0
  %2017 = vmatpush1.msra.mxu0 0.0
  %2018 = vmatprep.subr.mxu0 0.0
  %2019 = vmatpush1.msra.mxu0 0.0
  %2020 = vmatprep.subr.mxu0 0.0
  %2021 = vmatpush1.msra.mxu0 0.0
  %2022 = vmatprep.subr.mxu0 0.0
  %2023 = vmatpush1.msra.mxu0 0.0
  %2024 = vmatprep.subr.mxu0 0.0
  %2025 = vmatpush1.msra.mxu0 0.0
  %2026 = vmatprep.subr.mxu0 0.0
  %2027 = vmatpush1.msra.mxu0 0.0
  %2028 = vmatprep.subr.mxu0 0.0
  %2029 = vmatpush1.msra.mxu0 0.0
  %2030 = vmatprep.subr.mxu0 0.0
  %2031 = vmatpush1.msra.mxu0 0.0
  %2032 = vmatprep.subr.mxu0 0.0
  %2033 = vmatpush1.msra.mxu0 %v46
  %2034 = vmatprep.subr.mxu0 0.0
  %2035 = vmatpush1.msra.mxu0 %v45
  %2036 = vmatprep.subr.mxu0 0.0
  %2037 = vmatpush1.msra.mxu0 %v44
  %2038 = vmatprep.subr.mxu0 0.0
  %2039 = vmatpush1.msra.mxu0 %v43
  %2040 = vmatprep.subr.mxu0 0.0
  %2041 = vmatpush2.msra.mxu0 0.0
  %2042 = vmatprep.subr.mxu0 0.0
  %2043 = vmatpush2.msra.mxu0 0.0
  %2044 = vmatprep.subr.mxu0 0.0
  %2045 = vmatpush2.msra.mxu0 0.0
  %2046 = vmatprep.subr.mxu0 0.0
  %2047 = vmatpush2.msra.mxu0 0.0
  %2048 = vmatprep.subr.mxu0 0.0
  %2049 = vmatpush2.msra.mxu0 0.0
  %2050 = vmatprep.subr.mxu0 0.0
  %2051 = vmatpush2.msra.mxu0 0.0
  %2052 = vmatprep.subr.mxu0 0.0
  %2053 = vmatpush2.msra.mxu0 0.0
  %2054 = vmatprep.subr.mxu0 0.0
  %2055 = vmatpush2.msra.mxu0 0.0
  %2056 = vmatprep.subr.mxu0 0.0
  %2057 = vmatpush2.msra.mxu0 0.0
  %2058 = vmatprep.subr.mxu0 0.0
  %2059 = vmatpush2.msra.mxu0 0.0
  %2060 = vmatprep.subr.mxu0 0.0
  %2061 = vmatpush2.msra.mxu0 0.0
  %2062 = vmatprep.subr.mxu0 0.0
  %2063 = vmatpush2.msra.mxu0 0.0
  %2064 = vmatprep.subr.mxu0 0.0
  %2065 = vmatpush2.msra.mxu0 0.0
  %2066 = vmatprep.subr.mxu0 0.0
  %2067 = vmatpush2.msra.mxu0 0.0
  %2068 = vmatprep.subr.mxu0 0.0
  %2069 = vmatpush2.msra.mxu0 0.0
  %2070 = vmatprep.subr.mxu0 0.0
  %2071 = vmatpush2.msra.mxu0 0.0
  %2072 = vmatprep.mubr.f32.mxu0 0.0
  %2073 = vmatmul.mubr.f32.gmra.mxu0 %v2006
  %v2074 = vpop.f32.mrf.mxu0
  %v2075 = vadd.f32 %v52, %v2074
  %v2076 = vpop.f32.mrf.mxu0
  %2077 = vdwg.mxu0
  %v2078 = vmul.f32 %v2002, 0.5
  %v2079 = vtanh.pop %v2078
  %v2080 = vmul.f32 %v2079, 0.5
  %v2081 = vadd.f32 %v2080, 0.5
  %v2082 = vtanh.pop %v2002
  %v2083 = vmul.f32 %v2081, %v1826
  %2085 = vrot.lane.b32.xlu0 %v2082, 32
  %v2086 = vpop.permute.xlu0 %2085
  %v2088 = vmul.f32 %v2081, %v2086
  %2090 = vrot.lane.b32.xlu0 %v2088, 32
  %v2091 = vpop.permute.xlu0 %2090
  %v2093 = vadd.f32 %v2083, %v2091
  %v2094 = vtanh.pop %v2093
  %2096 = vrot.lane.b32.xlu0 %v2094, 32
  %v2097 = vpop.permute.xlu0 %2096
  %v2099 = vmul.f32 %v2081, %v2097
  %2101 = vrot.lane.b32.xlu0 %v2099, 64
  %v2102 = vpop.permute.xlu0 %2101
  %v2103 = vsel %vm56, %v2102, 0
  %2105 = vmatprep.subr.mxu0 0.0
  %2106 = vmatpush1.msra.mxu0 0.0
  %2107 = vmatprep.subr.mxu0 0.0
  %2108 = vmatpush1.msra.mxu0 0.0
  %2109 = vmatprep.subr.mxu0 0.0
  %2110 = vmatpush1.msra.mxu0 0.0
  %2111 = vmatprep.subr.mxu0 0.0
  %2112 = vmatpush1.msra.mxu0 0.0
  %2113 = vmatprep.subr.mxu0 0.0
  %2114 = vmatpush1.msra.mxu0 0.0
  %2115 = vmatprep.subr.mxu0 0.0
  %2116 = vmatpush1.msra.mxu0 0.0
  %2117 = vmatprep.subr.mxu0 0.0
  %2118 = vmatpush1.msra.mxu0 0.0
  %2119 = vmatprep.subr.mxu0 0.0
  %2120 = vmatpush1.msra.mxu0 0.0
  %2121 = vmatprep.subr.mxu0 0.0
  %2122 = vmatpush1.msra.mxu0 0.0
  %2123 = vmatprep.subr.mxu0 0.0
  %2124 = vmatpush1.msra.mxu0 0.0
  %2125 = vmatprep.subr.mxu0 0.0
  %2126 = vmatpush1.msra.mxu0 0.0
  %2127 = vmatprep.subr.mxu0 0.0
  %2128 = vmatpush1.msra.mxu0 0.0
  %2129 = vmatprep.subr.mxu0 0.0
  %2130 = vmatpush1.msra.mxu0 %v42
  %2131 = vmatprep.subr.mxu0 0.0
  %2132 = vmatpush1.msra.mxu0 %v41
  %2133 = vmatprep.subr.mxu0 0.0
  %2134 = vmatpush1.msra.mxu0 %v40
  %2135 = vmatprep.subr.mxu0 0.0
  %2136 = vmatpush1.msra.mxu0 %v39
  %2137 = vmatprep.subr.mxu0 0.0
  %2138 = vmatpush2.msra.mxu0 0.0
  %2139 = vmatprep.subr.mxu0 0.0
  %2140 = vmatpush2.msra.mxu0 0.0
  %2141 = vmatprep.subr.mxu0 0.0
  %2142 = vmatpush2.msra.mxu0 0.0
  %2143 = vmatprep.subr.mxu0 0.0
  %2144 = vmatpush2.msra.mxu0 0.0
  %2145 = vmatprep.subr.mxu0 0.0
  %2146 = vmatpush2.msra.mxu0 0.0
  %2147 = vmatprep.subr.mxu0 0.0
  %2148 = vmatpush2.msra.mxu0 0.0
  %2149 = vmatprep.subr.mxu0 0.0
  %2150 = vmatpush2.msra.mxu0 0.0
  %2151 = vmatprep.subr.mxu0 0.0
  %2152 = vmatpush2.msra.mxu0 0.0
  %2153 = vmatprep.subr.mxu0 0.0
  %2154 = vmatpush2.msra.mxu0 0.0
  %2155 = vmatprep.subr.mxu0 0.0
  %2156 = vmatpush2.msra.mxu0 0.0
  %2157 = vmatprep.subr.mxu0 0.0
  %2158 = vmatpush2.msra.mxu0 0.0
  %2159 = vmatprep.subr.mxu0 0.0
  %2160 = vmatpush2.msra.mxu0 0.0
  %2161 = vmatprep.subr.mxu0 0.0
  %2162 = vmatpush2.msra.mxu0 0.0
  %2163 = vmatprep.subr.mxu0 0.0
  %2164 = vmatpush2.msra.mxu0 0.0
  %2165 = vmatprep.subr.mxu0 0.0
  %2166 = vmatpush2.msra.mxu0 0.0
  %2167 = vmatprep.subr.mxu0 0.0
  %2168 = vmatpush2.msra.mxu0 0.0
  %2169 = vmatprep.mubr.f32.mxu0 0.0
  %2170 = vmatmul.mubr.f32.gmra.mxu0 %v2103
  %v2171 = vpop.f32.mrf.mxu0
  %v2172 = vadd.f32 %v2075, %v2171
  %v2173 = vpop.f32.mrf.mxu0
  %2174 = vdwg.mxu0
  %v2175 = vmul.f32 %v2172, 0.5
  %v2176 = vtanh.pop %v2175
  %v2177 = vmul.f32 %v2176, 0.5
  %v2178 = vadd.f32 %v2177, 0.5
  %v2179 = vtanh.pop %v2172
  %v2180 = vmul.f32 %v2178, %v1923
  %2182 = vrot.lane.b32.xlu0 %v2179, 32
  %v2183 = vpop.permute.xlu0 %2182
  %v2185 = vmul.f32 %v2178, %v2183
  %2187 = vrot.lane.b32.xlu0 %v2185, 32
  %v2188 = vpop.permute.xlu0 %2187
  %v2190 = vadd.f32 %v2180, %v2188
  %v2191 = vtanh.pop %v2190
  %2193 = vrot.lane.b32.xlu0 %v2191, 32
  %v2194 = vpop.permute.xlu0 %2193
  %v2196 = vmul.f32 %v2178, %v2194
  %2199 = vrot.lane.b32.xlu0 %v2196, 96
  %v2200 = vpop.permute.xlu0 %2199
  %2203 = vrot.lane.b32.xlu0 %v2093, 32
  %v2204 = vpop.permute.xlu0 %2203
  %2207 = vrot.lane.b32.xlu0 %v2190, 64
  %v2208 = vpop.permute.xlu0 %2207
  %v2210 = vsel %vm56, %v2102, %v2200
  %vm2211 = vcmask 523264
  %v2212 = vsel %vm2211, %v2210, %v2204
  %vm2213 = vcmask 785408
  %v2214 = vsel %vm2213, %v2212, %v2208
  %2215 = vst [vmem:[%s8] sm:$0xff] %v2214
  // Predicated region
  $region34: #{sentiment_lstm_forward.1} parent=0 // pred_check
    %p2216 = pneg %p30
  $region35: #{sentiment_lstm_forward.1} parent=0 // pred_check_branch
    %2218 = sbr.rel (%p2216) target = $region37
  $region36: #{sentiment_lstm_forward.1} parent=0 // pred_region
    %v2219 = vld [vmem:[%s5] sm:$0x1]
    %v2221 = vlaneseq
    %v2222 = vshrl.u32 %v2221, 7
    %v2223 = vsub.s32 0, %v2222
    %v2224 = vrot.slane %v2219, %v2223
    %2225 = vrot.lane.b32.xlu0 %v2224, 64
    %v2226 = vpop.permute.xlu0 %2225
    %v2228 = vmul.f32 %v2196, %v2226
    %2230 = vrot.lane.b32.xlu0 %v2228, 64
    %v2231 = vpop.permute.xlu0 %2230
    %v2233 = vsel %vm56, %v2231, 0.0
    %2234 = vadd.xlane.f32.xlu0 %v2233
    %v2235 = vpop.xlane.xlu0 %2234
    %v2236 = vld [vmem:[#allocation2] sm:$0x1]
    %v2238 = vlaneseq
    %v2239 = vshrl.u32 %v2238, 7
    %v2240 = vsub.s32 0, %v2239
    %v2241 = vrot.slane %v2236, %v2240
    %v2243 = vadd.f32 %v2235, %v2241
    %v2244 = vmul.f32 %v2243, 0.5
    %v2245 = vtanh.pop %v2244
    %v2246 = vmul.f32 %v2245, 0.5
    %v2247 = vadd.f32 %v2246, 0.5
    %2249 = vset.pattern.permute.xlu0 0
    %2250 = vperm.xlu0 %2249, %v2247
    %v2251 = vpop.permute.xlu0 %2250
    %2253 = vst [vmem:[%s7] sm:$0xff] %v2251
  $region37: #{sentiment_lstm_forward.1} parent=0 // pred_fallthru
    _
  // Predicated region
  $region38: #{sentiment_lstm_forward.1} parent=0 // pred_check
    _
  $region39: #{sentiment_lstm_forward.1} parent=0 // pred_check_branch
    %2255 = sbr.rel (0) target = $region41
  $region40: #{sentiment_lstm_forward.1} parent=0 // pred_region
    _
  $region41: #{sentiment_lstm_forward.1} parent=0 // pred_fallthru
    _
  // Predicated region
  $region42: #{sentiment_lstm_forward.1} parent=0 // pred_check
    _
  $region43: #{sentiment_lstm_forward.1} parent=0 // pred_check_branch
    %2257 = sbr.rel (0) target = $region45
  $region44: #{sentiment_lstm_forward.1} parent=0 // pred_region
    _
  $region45: #{sentiment_lstm_forward.1} parent=0 // pred_fallthru
    _
  // Predicated region
  $region46: #{sentiment_lstm_forward.1} parent=0 // pred_check
    _
  $region47: #{sentiment_lstm_forward.1} parent=0 // pred_check_branch
    %2259 = sbr.rel (0) target = $region49
  $region48: #{sentiment_lstm_forward.1} parent=0 // pred_region
    _
  $region49: #{sentiment_lstm_forward.1} parent=0 // pred_fallthru
    _
  // Predicated region
  $region50: #{sentiment_lstm_forward.1} parent=0 // pred_check
    _
  $region51: #{sentiment_lstm_forward.1} parent=0 // pred_check_branch
    %2261 = sbr.rel (0) target = $region53
  $region52: #{sentiment_lstm_forward.1} parent=0 // pred_region
    _
  $region53: #{sentiment_lstm_forward.1} parent=0 // pred_fallthru
    _

</llo_original>
